<compile_context>
chip_gen: v6e
topology: v6e:2x2x1
jax: 0.10.0
libtpu: 0.0.40
codegen_flags: <defaults>
</compile_context>

<pallas_src>
import functools

import jax
import jax.numpy as jnp
from jax.experimental import pallas as pl
from jax.experimental.pallas import tpu as pltpu

LN_EPS = 1e-5
BN_EPS = 1e-5


def _round_up(v, m):
    return ((v + m - 1) // m) * m


def _ccm_kernel(x_ref, ln_g_ref, ln_b_ref, w1a_ref, b1a_ref, w1g_ref, b1g_ref,
                dw_w_ref, dw_b_ref, w2_ref, b2_ref, o_ref, *, n_valid):
    """One (batch element, sequence tile) step.

    x_ref : (1, 1, window, dim)  overlapping input window, window = tile_n + 2*halo
    o_ref : (1, tile_n, dim)     output rows j*tile_n .. j*tile_n + tile_n - 1
    """
    j = pl.program_id(1)
    window, dim = x_ref.shape[2], x_ref.shape[3]
    tile_n = o_ref.shape[1]
    K = dw_w_ref.shape[0]
    pad = (K - 1) // 2
    halo = (window - tile_n) // 2
    base = halo - pad  # first window row needed by output row 0

    xw = x_ref[0, 0]  # (window, dim) f32

    # ---- LayerNorm over the channel dim (f32) ----
    mu = jnp.mean(xw, axis=-1, keepdims=True)
    xc = xw - mu
    var = jnp.mean(xc * xc, axis=-1, keepdims=True)
    y = xc * jax.lax.rsqrt(var + LN_EPS) * ln_g_ref[...] + ln_b_ref[...]

    # ---- pointwise Conv1d(dim -> 2*inner) split into value/gate halves + GLU ----
    # (bf16 MXU operands by default, f32 accumulation; no (n, 2*inner) intermediate)
    yc = y.astype(w1a_ref.dtype)
    a = jnp.dot(yc, w1a_ref[...], preferred_element_type=jnp.float32) + b1a_ref[...]
    g = jnp.dot(yc, w1g_ref[...], preferred_element_type=jnp.float32) + b1g_ref[...]
    u = a * jax.nn.sigmoid(g)  # (window, inner) f32

    # Zero rows whose global position lies outside [0, n): this reproduces the
    # depthwise conv's zero padding.  (Must be applied to u, not x, because the
    # LayerNorm beta / conv biases make zero-padded x rows nonzero after GLU.)
    row = jax.lax.broadcasted_iota(jnp.int32, (window, 1), 0)
    gidx = j * tile_n - halo + row
    u = jnp.where((gidx >= 0) & (gidx < n_valid), u, 0.0)

    # ---- depthwise Conv1d(kernel_size=K, groups=inner); BatchNorm pre-folded ----
    dw = dw_w_ref[...]  # (K, inner) loaded once; rows indexed from the value
    acc = dw_b_ref[...] + u[base:base + tile_n, :] * dw[0:1, :]
    for k in range(1, K):  # K is small & static -> fully unrolled shifted MAC
        acc = acc + u[base + k:base + k + tile_n, :] * dw[k:k + 1, :]

    # ---- SiLU + pointwise Conv1d(inner -> dim); Dropout(p=0) is identity ----
    v = acc * jax.nn.sigmoid(acc)
    out = jnp.dot(v.astype(w2_ref.dtype), w2_ref[...],
                  preferred_element_type=jnp.float32) + b2_ref[...]
    o_ref[0] = out.astype(o_ref.dtype)


def _build_windows(x, tile_n, halo, n_tiles):
    """(B, n, dim) -> (B, n_tiles, tile_n + 2*halo, dim) overlapping windows."""
    B, n, dim = x.shape
    window = tile_n + 2 * halo
    padded_n = n_tiles * tile_n + 2 * halo
    x_pad = jnp.pad(x, ((0, 0), (halo, padded_n - halo - n), (0, 0)))
    wins = [jax.lax.slice_in_dim(x_pad, j * tile_n, j * tile_n + window, axis=1)
            for j in range(n_tiles)]
    return jnp.stack(wins, axis=1)


def _vmem_limit_bytes(tile_n, window, dim, inner, K, compute_dtype):
    """Explicit scoped-VMEM budget from the per-step resident set (+ headroom)."""
    f32 = 4
    cb = jnp.dtype(compute_dtype).itemsize
    blocks = 2 * window * dim * f32 + 2 * tile_n * dim * f32          # x / out (dbl buf)
    weights = 2 * (2 * dim * f32                                      # LN gamma/beta
                   + 2 * dim * inner * cb + 2 * inner * f32           # w1a,w1g,b1a,b1g
                   + K * inner * f32 + inner * f32                    # dw weight/bias
                   + inner * dim * cb + dim * f32)                    # w2, b2
    interm = (3 * window * inner + window * dim
              + 3 * tile_n * inner + 2 * tile_n * dim) * f32          # y,a,g,u,acc,v,out
    est = blocks + weights + 2 * interm
    return int(min(max(2 * est, 16 * 1024 * 1024), 48 * 1024 * 1024))


def conformer_conv_module(x, params, *, tile_n=None, compute_dtype=jnp.bfloat16):
    B, n, dim = x.shape
    K, inner = params["dw_w"].shape
    assert K % 2 == 1, "only odd kernel_size gives symmetric 'same' padding (PyTorch default 31)"
    pad = (K - 1) // 2

    if tile_n is None:
        tile_n = min(256, _round_up(n, 8))      # lane/sublane-aligned, VMEM-friendly
    tile_n = max(8, _round_up(tile_n, 8))
    halo = _round_up(pad, 4)                    # keeps window a multiple of 8 rows
    window = tile_n + 2 * halo
    n_tiles = (n + tile_n - 1) // tile_n

    # ---- fold BatchNorm1d (inference running stats) into the depthwise conv ----
    bn_s = params["bn_gamma"] * jax.lax.rsqrt(params["bn_var"] + BN_EPS)
    bn_o = params["bn_beta"] - params["bn_mean"] * bn_s
    dw_w = (params["dw_w"] * bn_s[None, :]).astype(jnp.float32)
    dw_b = (params["dw_b"] * bn_s + bn_o).reshape(1, inner).astype(jnp.float32)

    # ---- split pointwise conv #1 into value/gate halves; cast matmul weights ----
    w1a = params["w1"][:, :inner].astype(compute_dtype)
    w1g = params["w1"][:, inner:].astype(compute_dtype)
    b1a = params["b1"][:inner].reshape(1, inner).astype(jnp.float32)
    b1g = params["b1"][inner:].reshape(1, inner).astype(jnp.float32)
    w2 = params["w2"].astype(compute_dtype)
    b2 = params["b2"].reshape(1, dim).astype(jnp.float32)
    ln_g = params["ln_g"].reshape(1, dim).astype(jnp.float32)
    ln_b = params["ln_b"].reshape(1, dim).astype(jnp.float32)

    x_win = _build_windows(x.astype(jnp.float32), tile_n, halo, n_tiles)

    def rep(shape):  # replicated (constant index-map) parameter block
        return pl.BlockSpec(shape, lambda b, j, _nd=len(shape): (0,) * _nd)

    grid_spec = pltpu.PrefetchScalarGridSpec(
        num_scalar_prefetch=0,
        grid=(B, n_tiles),
        in_specs=[
            pl.BlockSpec((1, 1, window, dim), lambda b, j: (b, j, 0, 0)),  # x windows
            rep((1, dim)), rep((1, dim)),                                  # LN gamma/beta
            rep((dim, inner)), rep((1, inner)),                            # w1a, b1a
            rep((dim, inner)), rep((1, inner)),                            # w1g, b1g
            rep((K, inner)), rep((1, inner)),                              # depthwise (BN folded)
            rep((inner, dim)), rep((1, dim)),                              # w2, b2
        ],
        out_specs=pl.BlockSpec((1, tile_n, dim), lambda b, j: (b, j, 0)),
    )

    kernel = functools.partial(_ccm_kernel, n_valid=n)
    return pl.pallas_call(
        kernel,
        out_shape=jax.ShapeDtypeStruct((B, n, dim), x.dtype),
        grid_spec=grid_spec,
        compiler_params=pltpu.CompilerParams(
            dimension_semantics=("parallel", "parallel"),
            vmem_limit_bytes=_vmem_limit_bytes(tile_n, window, dim, inner, K,
                                               compute_dtype)),
    )(x_win, ln_g, ln_b, w1a, b1a, w1g, b1g, dw_w, dw_b, w2, b2)


def init_params(key, dim, expansion_factor=2, kernel_size=31):
    inner = dim * expansion_factor
    ks = jax.random.split(key, 12)
    nrm = lambda k, s: 0.1 * jax.random.normal(k, s, jnp.float32)
    return dict(
        ln_g=1.0 + nrm(ks[0], (dim,)),
        ln_b=nrm(ks[1], (dim,)),
        w1=nrm(ks[2], (dim, 2 * inner)),          # Conv1d(dim, 2*inner, 1) weight, (in, out)
        b1=nrm(ks[3], (2 * inner,)),
        dw_w=nrm(ks[4], (kernel_size, inner)),    # depthwise weight (K, C) from (C, 1, K)
        dw_b=nrm(ks[5], (inner,)),
        bn_gamma=1.0 + nrm(ks[6], (inner,)),
        bn_beta=nrm(ks[7], (inner,)),
        bn_mean=nrm(ks[8], (inner,)),
        bn_var=1.0 + jnp.abs(nrm(ks[9], (inner,))),
        w2=nrm(ks[10], (inner, dim)),             # Conv1d(inner, dim, 1) weight, (in, out)
        b2=nrm(ks[11], (dim,)),
    )


def reference(x, params):
    """Plain-JAX mirror of the PyTorch module forward (channels-last, f32)."""
    K, inner = params["dw_w"].shape
    pad = (K - 1) // 2
    n = x.shape[1]
    mu = jnp.mean(x, axis=-1, keepdims=True)
    var = jnp.mean((x - mu) ** 2, axis=-1, keepdims=True)
    y = (x - mu) * jax.lax.rsqrt(var + LN_EPS) * params["ln_g"] + params["ln_b"]
    h = y @ params["w1"] + params["b1"]
    u = h[..., :inner] * jax.nn.sigmoid(h[..., inner:])
    up = jnp.pad(u, ((0, 0), (pad, pad), (0, 0)))
    acc = jnp.zeros_like(u)
    for k in range(K):
        acc = acc + up[:, k:k + n, :] * params["dw_w"][k]
    acc = acc + params["dw_b"]
    s = params["bn_gamma"] * jax.lax.rsqrt(params["bn_var"] + BN_EPS)
    v = (acc - params["bn_mean"]) * s + params["bn_beta"]
    v = v * jax.nn.sigmoid(v)
    return v @ params["w2"] + params["b2"]


if __name__ == "__main__":
    key = jax.random.PRNGKey(0)
    kx, kp = jax.random.split(key)
    B, n, dim = 2, 16, 8                      # small demo: batch=2, seq=16, dim=8 (inner=16)
    x = jax.random.normal(kx, (B, n, dim), jnp.float32)
    params = init_params(kp, dim, expansion_factor=2, kernel_size=31)

    ref = reference(x, params)

    # f32 matmul path, tile_n=8 -> 2 sequence tiles per batch element (exercises
    # the halo/masking logic); tight structural check.
    out_f32 = jax.block_until_ready(
        conformer_conv_module(x, params, tile_n=8, compute_dtype=jnp.float32))
    assert out_f32.shape == (B, n, dim)
    assert jnp.allclose(out_f32, ref, atol=1e-3, rtol=1e-3), \
        "Pallas kernel (f32 matmul) mismatch vs JAX reference"

    # Default bf16-MXU path (f32 accumulation); looser tolerance for bf16 operands.
    out_bf16 = jax.block_until_ready(
        conformer_conv_module(x, params, tile_n=8, compute_dtype=jnp.bfloat16))
    assert out_bf16.shape == (B, n, dim)
    assert jnp.allclose(out_bf16, ref, atol=2e-2, rtol=2e-2), \
        "Pallas kernel (bf16 matmul) mismatch vs JAX reference"

    print("KERNEL_OK")
</pallas_src>

<mosaic_0001>
module attributes {stable_mosaic.version = 11 : i64} {
  func.func @_ccm_kernel(%arg0: i32, %arg1: i32, %arg2: memref<1x1x40x8xf32, #tpu.memory_space<vmem>>, %arg3: memref<1x8xf32, #tpu.memory_space<vmem>>, %arg4: memref<1x8xf32, #tpu.memory_space<vmem>>, %arg5: memref<8x16xf32, #tpu.memory_space<vmem>>, %arg6: memref<1x16xf32, #tpu.memory_space<vmem>>, %arg7: memref<8x16xf32, #tpu.memory_space<vmem>>, %arg8: memref<1x16xf32, #tpu.memory_space<vmem>>, %arg9: memref<31x16xf32, #tpu.memory_space<vmem>>, %arg10: memref<1x16xf32, #tpu.memory_space<vmem>>, %arg11: memref<16x8xf32, #tpu.memory_space<vmem>>, %arg12: memref<1x8xf32, #tpu.memory_space<vmem>>, %arg13: memref<1x8x8xf32, #tpu.memory_space<vmem>>) attributes {dimension_semantics = [#tpu.dimension_semantics<parallel>, #tpu.dimension_semantics<parallel>], iteration_bounds = array<i64: 2, 2>, scalar_prefetch = 0 : i64, scratch_operands = 0 : i64, tpu.core_type = #tpu.core_type<tc>, window_params = [{transform_indices = @transform_0, window_bounds = array<i64: 1, 1, 40, 8>}, {pipeline_mode = #tpu.pipeline_mode<synchronous>, transform_indices = @transform_1, window_bounds = array<i64: 1, 8>}, {pipeline_mode = #tpu.pipeline_mode<synchronous>, transform_indices = @transform_2, window_bounds = array<i64: 1, 8>}, {pipeline_mode = #tpu.pipeline_mode<synchronous>, transform_indices = @transform_3, window_bounds = array<i64: 8, 16>}, {pipeline_mode = #tpu.pipeline_mode<synchronous>, transform_indices = @transform_4, window_bounds = array<i64: 1, 16>}, {pipeline_mode = #tpu.pipeline_mode<synchronous>, transform_indices = @transform_5, window_bounds = array<i64: 8, 16>}, {pipeline_mode = #tpu.pipeline_mode<synchronous>, transform_indices = @transform_6, window_bounds = array<i64: 1, 16>}, {pipeline_mode = #tpu.pipeline_mode<synchronous>, transform_indices = @transform_7, window_bounds = array<i64: 31, 16>}, {pipeline_mode = #tpu.pipeline_mode<synchronous>, transform_indices = @transform_8, window_bounds = array<i64: 1, 16>}, {pipeline_mode = #tpu.pipeline_mode<synchronous>, transform_indices = @transform_9, window_bounds = array<i64: 16, 8>}, {pipeline_mode = #tpu.pipeline_mode<synchronous>, transform_indices = @transform_10, window_bounds = array<i64: 1, 8>}, {transform_indices = @transform_11, window_bounds = array<i64: 1, 8, 8>}]} {
    %c0 = arith.constant 0 : index
    %c0_0 = arith.constant 0 : index
    %c0_1 = arith.constant 0 : index
    %c0_2 = arith.constant 0 : index
    %0 = vector.load %arg2[%c0, %c0_0, %c0_1, %c0_2] : memref<1x1x40x8xf32, #tpu.memory_space<vmem>>, vector<1x1x40x8xf32>
    %1 = vector.shape_cast %0 : vector<1x1x40x8xf32> to vector<40x8xf32>
    %cst = arith.constant dense<0.000000e+00> : vector<40xf32>
    %2 = vector.multi_reduction <add>, %1, %cst [1] : vector<40x8xf32> to vector<40xf32>
    %3 = vector.shape_cast %2 : vector<40xf32> to vector<40x1xf32>
    %cst_3 = arith.constant 8.000000e+00 : f32
    %4 = vector.broadcast %cst_3 : f32 to vector<40x1xf32>
    %5 = arith.divf %3, %4 : vector<40x1xf32>
    %6 = vector.broadcast %5 : vector<40x1xf32> to vector<40x8xf32>
    %7 = arith.subf %1, %6 : vector<40x8xf32>
    %8 = arith.mulf %7, %7 : vector<40x8xf32>
    %cst_4 = arith.constant dense<0.000000e+00> : vector<40xf32>
    %9 = vector.multi_reduction <add>, %8, %cst_4 [1] : vector<40x8xf32> to vector<40xf32>
    %10 = vector.shape_cast %9 : vector<40xf32> to vector<40x1xf32>
    %cst_5 = arith.constant 8.000000e+00 : f32
    %11 = vector.broadcast %cst_5 : f32 to vector<40x1xf32>
    %12 = arith.divf %10, %11 : vector<40x1xf32>
    %cst_6 = arith.constant 9.99999974E-6 : f32
    %13 = vector.broadcast %cst_6 : f32 to vector<40x1xf32>
    %14 = arith.addf %12, %13 : vector<40x1xf32>
    %15 = math.rsqrt %14 : vector<40x1xf32>
    %16 = vector.broadcast %15 : vector<40x1xf32> to vector<40x8xf32>
    %17 = arith.mulf %7, %16 : vector<40x8xf32>
    %c0_7 = arith.constant 0 : index
    %c0_8 = arith.constant 0 : index
    %18 = vector.load %arg3[%c0_7, %c0_8] : memref<1x8xf32, #tpu.memory_space<vmem>>, vector<1x8xf32>
    %19 = vector.broadcast %18 : vector<1x8xf32> to vector<40x8xf32>
    %20 = arith.mulf %17, %19 : vector<40x8xf32>
    %c0_9 = arith.constant 0 : index
    %c0_10 = arith.constant 0 : index
    %21 = vector.load %arg4[%c0_9, %c0_10] : memref<1x8xf32, #tpu.memory_space<vmem>>, vector<1x8xf32>
    %22 = vector.broadcast %21 : vector<1x8xf32> to vector<40x8xf32>
    %23 = arith.addf %20, %22 : vector<40x8xf32>
    %c0_11 = arith.constant 0 : index
    %c0_12 = arith.constant 0 : index
    %24 = vector.load %arg5[%c0_11, %c0_12] : memref<8x16xf32, #tpu.memory_space<vmem>>, vector<8x16xf32>
    %cst_13 = arith.constant dense<0.000000e+00> : vector<40x16xf32>
    %25 = tpu.matmul %23, %24, %cst_13 {dimension_numbers = #tpu.dot_dimension_numbers<[1], [0], [0], [1], [0, 0, 1, 1], [], []>} : vector<40x8xf32>, vector<8x16xf32>, vector<40x16xf32> -> vector<40x16xf32>
    %c0_14 = arith.constant 0 : index
    %c0_15 = arith.constant 0 : index
    %26 = vector.load %arg6[%c0_14, %c0_15] : memref<1x16xf32, #tpu.memory_space<vmem>>, vector<1x16xf32>
    %27 = vector.broadcast %26 : vector<1x16xf32> to vector<40x16xf32>
    %28 = arith.addf %25, %27 : vector<40x16xf32>
    %c0_16 = arith.constant 0 : index
    %c0_17 = arith.constant 0 : index
    %29 = vector.load %arg7[%c0_16, %c0_17] : memref<8x16xf32, #tpu.memory_space<vmem>>, vector<8x16xf32>
    %cst_18 = arith.constant dense<0.000000e+00> : vector<40x16xf32>
    %30 = tpu.matmul %23, %29, %cst_18 {dimension_numbers = #tpu.dot_dimension_numbers<[1], [0], [0], [1], [0, 0, 1, 1], [], []>} : vector<40x8xf32>, vector<8x16xf32>, vector<40x16xf32> -> vector<40x16xf32>
    %c0_19 = arith.constant 0 : index
    %c0_20 = arith.constant 0 : index
    %31 = vector.load %arg8[%c0_19, %c0_20] : memref<1x16xf32, #tpu.memory_space<vmem>>, vector<1x16xf32>
    %32 = vector.broadcast %31 : vector<1x16xf32> to vector<40x16xf32>
    %33 = arith.addf %30, %32 : vector<40x16xf32>
    %34 = arith.negf %33 : vector<40x16xf32>
    %35 = math.exp %34 : vector<40x16xf32>
    %cst_21 = arith.constant 1.000000e+00 : f32
    %36 = vector.broadcast %cst_21 : f32 to vector<40x16xf32>
    %37 = arith.addf %36, %35 : vector<40x16xf32>
    %38 = arith.divf %36, %37 : vector<40x16xf32>
    %39 = arith.mulf %28, %38 : vector<40x16xf32>
    %40 = tpu.iota {dimensions = array<i32: 0>} : vector<40x1xi32>
    %c8_i32 = arith.constant 8 : i32
    %41 = arith.muli %arg1, %c8_i32 : i32
    %c16_i32 = arith.constant 16 : i32
    %42 = arith.subi %41, %c16_i32 : i32
    %43 = vector.broadcast %42 : i32 to vector<40x1xi32>
    %44 = arith.addi %43, %40 : vector<40x1xi32>
    %c0_i32 = arith.constant 0 : i32
    %45 = vector.broadcast %c0_i32 : i32 to vector<40x1xi32>
    %46 = arith.cmpi sge, %44, %45 : vector<40x1xi32>
    %c16_i32_22 = arith.constant 16 : i32
    %47 = vector.broadcast %c16_i32_22 : i32 to vector<40x1xi32>
    %48 = arith.cmpi slt, %44, %47 : vector<40x1xi32>
    %49 = arith.andi %46, %48 : vector<40x1xi1>
    %cst_23 = arith.constant 0.000000e+00 : f32
    %50 = vector.shape_cast %49 : vector<40x1xi1> to vector<40x1xi1>
    %51 = vector.broadcast %50 : vector<40x1xi1> to vector<40x16xi1>
    %52 = vector.broadcast %cst_23 : f32 to vector<40x16xf32>
    %53 = arith.select %51, %39, %52 : vector<40x16xi1>, vector<40x16xf32>
    %c0_24 = arith.constant 0 : index
    %c0_25 = arith.constant 0 : index
    %54 = vector.load %arg9[%c0_24, %c0_25] : memref<31x16xf32, #tpu.memory_space<vmem>>, vector<31x16xf32>
    %c0_26 = arith.constant 0 : index
    %c0_27 = arith.constant 0 : index
    %55 = vector.load %arg10[%c0_26, %c0_27] : memref<1x16xf32, #tpu.memory_space<vmem>>, vector<1x16xf32>
    %56 = vector.extract_strided_slice %53 {offsets = [1, 0], sizes = [8, 16], strides = [1, 1]} : vector<40x16xf32> to vector<8x16xf32>
    %57 = vector.extract_strided_slice %54 {offsets = [0, 0], sizes = [1, 16], strides = [1, 1]} : vector<31x16xf32> to vector<1x16xf32>
    %58 = vector.broadcast %57 : vector<1x16xf32> to vector<8x16xf32>
    %59 = arith.mulf %56, %58 : vector<8x16xf32>
    %60 = vector.broadcast %55 : vector<1x16xf32> to vector<8x16xf32>
    %61 = arith.addf %60, %59 : vector<8x16xf32>
    %62 = vector.extract_strided_slice %53 {offsets = [2, 0], sizes = [8, 16], strides = [1, 1]} : vector<40x16xf32> to vector<8x16xf32>
    %63 = vector.extract_strided_slice %54 {offsets = [1, 0], sizes = [1, 16], strides = [1, 1]} : vector<31x16xf32> to vector<1x16xf32>
    %64 = vector.broadcast %63 : vector<1x16xf32> to vector<8x16xf32>
    %65 = arith.mulf %62, %64 : vector<8x16xf32>
    %66 = arith.addf %61, %65 : vector<8x16xf32>
    %67 = vector.extract_strided_slice %53 {offsets = [3, 0], sizes = [8, 16], strides = [1, 1]} : vector<40x16xf32> to vector<8x16xf32>
    %68 = vector.extract_strided_slice %54 {offsets = [2, 0], sizes = [1, 16], strides = [1, 1]} : vector<31x16xf32> to vector<1x16xf32>
    %69 = vector.broadcast %68 : vector<1x16xf32> to vector<8x16xf32>
    %70 = arith.mulf %67, %69 : vector<8x16xf32>
    %71 = arith.addf %66, %70 : vector<8x16xf32>
    %72 = vector.extract_strided_slice %53 {offsets = [4, 0], sizes = [8, 16], strides = [1, 1]} : vector<40x16xf32> to vector<8x16xf32>
    %73 = vector.extract_strided_slice %54 {offsets = [3, 0], sizes = [1, 16], strides = [1, 1]} : vector<31x16xf32> to vector<1x16xf32>
    %74 = vector.broadcast %73 : vector<1x16xf32> to vector<8x16xf32>
    %75 = arith.mulf %72, %74 : vector<8x16xf32>
    %76 = arith.addf %71, %75 : vector<8x16xf32>
    %77 = vector.extract_strided_slice %53 {offsets = [5, 0], sizes = [8, 16], strides = [1, 1]} : vector<40x16xf32> to vector<8x16xf32>
    %78 = vector.extract_strided_slice %54 {offsets = [4, 0], sizes = [1, 16], strides = [1, 1]} : vector<31x16xf32> to vector<1x16xf32>
    %79 = vector.broadcast %78 : vector<1x16xf32> to vector<8x16xf32>
    %80 = arith.mulf %77, %79 : vector<8x16xf32>
    %81 = arith.addf %76, %80 : vector<8x16xf32>
    %82 = vector.extract_strided_slice %53 {offsets = [6, 0], sizes = [8, 16], strides = [1, 1]} : vector<40x16xf32> to vector<8x16xf32>
    %83 = vector.extract_strided_slice %54 {offsets = [5, 0], sizes = [1, 16], strides = [1, 1]} : vector<31x16xf32> to vector<1x16xf32>
    %84 = vector.broadcast %83 : vector<1x16xf32> to vector<8x16xf32>
    %85 = arith.mulf %82, %84 : vector<8x16xf32>
    %86 = arith.addf %81, %85 : vector<8x16xf32>
    %87 = vector.extract_strided_slice %53 {offsets = [7, 0], sizes = [8, 16], strides = [1, 1]} : vector<40x16xf32> to vector<8x16xf32>
    %88 = vector.extract_strided_slice %54 {offsets = [6, 0], sizes = [1, 16], strides = [1, 1]} : vector<31x16xf32> to vector<1x16xf32>
    %89 = vector.broadcast %88 : vector<1x16xf32> to vector<8x16xf32>
    %90 = arith.mulf %87, %89 : vector<8x16xf32>
    %91 = arith.addf %86, %90 : vector<8x16xf32>
    %92 = vector.extract_strided_slice %53 {offsets = [8, 0], sizes = [8, 16], strides = [1, 1]} : vector<40x16xf32> to vector<8x16xf32>
    %93 = vector.extract_strided_slice %54 {offsets = [7, 0], sizes = [1, 16], strides = [1, 1]} : vector<31x16xf32> to vector<1x16xf32>
    %94 = vector.broadcast %93 : vector<1x16xf32> to vector<8x16xf32>
    %95 = arith.mulf %92, %94 : vector<8x16xf32>
    %96 = arith.addf %91, %95 : vector<8x16xf32>
    %97 = vector.extract_strided_slice %53 {offsets = [9, 0], sizes = [8, 16], strides = [1, 1]} : vector<40x16xf32> to vector<8x16xf32>
    %98 = vector.extract_strided_slice %54 {offsets = [8, 0], sizes = [1, 16], strides = [1, 1]} : vector<31x16xf32> to vector<1x16xf32>
    %99 = vector.broadcast %98 : vector<1x16xf32> to vector<8x16xf32>
    %100 = arith.mulf %97, %99 : vector<8x16xf32>
    %101 = arith.addf %96, %100 : vector<8x16xf32>
    %102 = vector.extract_strided_slice %53 {offsets = [10, 0], sizes = [8, 16], strides = [1, 1]} : vector<40x16xf32> to vector<8x16xf32>
    %103 = vector.extract_strided_slice %54 {offsets = [9, 0], sizes = [1, 16], strides = [1, 1]} : vector<31x16xf32> to vector<1x16xf32>
    %104 = vector.broadcast %103 : vector<1x16xf32> to vector<8x16xf32>
    %105 = arith.mulf %102, %104 : vector<8x16xf32>
    %106 = arith.addf %101, %105 : vector<8x16xf32>
    %107 = vector.extract_strided_slice %53 {offsets = [11, 0], sizes = [8, 16], strides = [1, 1]} : vector<40x16xf32> to vector<8x16xf32>
    %108 = vector.extract_strided_slice %54 {offsets = [10, 0], sizes = [1, 16], strides = [1, 1]} : vector<31x16xf32> to vector<1x16xf32>
    %109 = vector.broadcast %108 : vector<1x16xf32> to vector<8x16xf32>
    %110 = arith.mulf %107, %109 : vector<8x16xf32>
    %111 = arith.addf %106, %110 : vector<8x16xf32>
    %112 = vector.extract_strided_slice %53 {offsets = [12, 0], sizes = [8, 16], strides = [1, 1]} : vector<40x16xf32> to vector<8x16xf32>
    %113 = vector.extract_strided_slice %54 {offsets = [11, 0], sizes = [1, 16], strides = [1, 1]} : vector<31x16xf32> to vector<1x16xf32>
    %114 = vector.broadcast %113 : vector<1x16xf32> to vector<8x16xf32>
    %115 = arith.mulf %112, %114 : vector<8x16xf32>
    %116 = arith.addf %111, %115 : vector<8x16xf32>
    %117 = vector.extract_strided_slice %53 {offsets = [13, 0], sizes = [8, 16], strides = [1, 1]} : vector<40x16xf32> to vector<8x16xf32>
    %118 = vector.extract_strided_slice %54 {offsets = [12, 0], sizes = [1, 16], strides = [1, 1]} : vector<31x16xf32> to vector<1x16xf32>
    %119 = vector.broadcast %118 : vector<1x16xf32> to vector<8x16xf32>
    %120 = arith.mulf %117, %119 : vector<8x16xf32>
    %121 = arith.addf %116, %120 : vector<8x16xf32>
    %122 = vector.extract_strided_slice %53 {offsets = [14, 0], sizes = [8, 16], strides = [1, 1]} : vector<40x16xf32> to vector<8x16xf32>
    %123 = vector.extract_strided_slice %54 {offsets = [13, 0], sizes = [1, 16], strides = [1, 1]} : vector<31x16xf32> to vector<1x16xf32>
    %124 = vector.broadcast %123 : vector<1x16xf32> to vector<8x16xf32>
    %125 = arith.mulf %122, %124 : vector<8x16xf32>
    %126 = arith.addf %121, %125 : vector<8x16xf32>
    %127 = vector.extract_strided_slice %53 {offsets = [15, 0], sizes = [8, 16], strides = [1, 1]} : vector<40x16xf32> to vector<8x16xf32>
    %128 = vector.extract_strided_slice %54 {offsets = [14, 0], sizes = [1, 16], strides = [1, 1]} : vector<31x16xf32> to vector<1x16xf32>
    %129 = vector.broadcast %128 : vector<1x16xf32> to vector<8x16xf32>
    %130 = arith.mulf %127, %129 : vector<8x16xf32>
    %131 = arith.addf %126, %130 : vector<8x16xf32>
    %132 = vector.extract_strided_slice %53 {offsets = [16, 0], sizes = [8, 16], strides = [1, 1]} : vector<40x16xf32> to vector<8x16xf32>
    %133 = vector.extract_strided_slice %54 {offsets = [15, 0], sizes = [1, 16], strides = [1, 1]} : vector<31x16xf32> to vector<1x16xf32>
    %134 = vector.broadcast %133 : vector<1x16xf32> to vector<8x16xf32>
    %135 = arith.mulf %132, %134 : vector<8x16xf32>
    %136 = arith.addf %131, %135 : vector<8x16xf32>
    %137 = vector.extract_strided_slice %53 {offsets = [17, 0], sizes = [8, 16], strides = [1, 1]} : vector<40x16xf32> to vector<8x16xf32>
    %138 = vector.extract_strided_slice %54 {offsets = [16, 0], sizes = [1, 16], strides = [1, 1]} : vector<31x16xf32> to vector<1x16xf32>
    %139 = vector.broadcast %138 : vector<1x16xf32> to vector<8x16xf32>
    %140 = arith.mulf %137, %139 : vector<8x16xf32>
    %141 = arith.addf %136, %140 : vector<8x16xf32>
    %142 = vector.extract_strided_slice %53 {offsets = [18, 0], sizes = [8, 16], strides = [1, 1]} : vector<40x16xf32> to vector<8x16xf32>
    %143 = vector.extract_strided_slice %54 {offsets = [17, 0], sizes = [1, 16], strides = [1, 1]} : vector<31x16xf32> to vector<1x16xf32>
    %144 = vector.broadcast %143 : vector<1x16xf32> to vector<8x16xf32>
    %145 = arith.mulf %142, %144 : vector<8x16xf32>
    %146 = arith.addf %141, %145 : vector<8x16xf32>
    %147 = vector.extract_strided_slice %53 {offsets = [19, 0], sizes = [8, 16], strides = [1, 1]} : vector<40x16xf32> to vector<8x16xf32>
    %148 = vector.extract_strided_slice %54 {offsets = [18, 0], sizes = [1, 16], strides = [1, 1]} : vector<31x16xf32> to vector<1x16xf32>
    %149 = vector.broadcast %148 : vector<1x16xf32> to vector<8x16xf32>
    %150 = arith.mulf %147, %149 : vector<8x16xf32>
    %151 = arith.addf %146, %150 : vector<8x16xf32>
    %152 = vector.extract_strided_slice %53 {offsets = [20, 0], sizes = [8, 16], strides = [1, 1]} : vector<40x16xf32> to vector<8x16xf32>
    %153 = vector.extract_strided_slice %54 {offsets = [19, 0], sizes = [1, 16], strides = [1, 1]} : vector<31x16xf32> to vector<1x16xf32>
    %154 = vector.broadcast %153 : vector<1x16xf32> to vector<8x16xf32>
    %155 = arith.mulf %152, %154 : vector<8x16xf32>
    %156 = arith.addf %151, %155 : vector<8x16xf32>
    %157 = vector.extract_strided_slice %53 {offsets = [21, 0], sizes = [8, 16], strides = [1, 1]} : vector<40x16xf32> to vector<8x16xf32>
    %158 = vector.extract_strided_slice %54 {offsets = [20, 0], sizes = [1, 16], strides = [1, 1]} : vector<31x16xf32> to vector<1x16xf32>
    %159 = vector.broadcast %158 : vector<1x16xf32> to vector<8x16xf32>
    %160 = arith.mulf %157, %159 : vector<8x16xf32>
    %161 = arith.addf %156, %160 : vector<8x16xf32>
    %162 = vector.extract_strided_slice %53 {offsets = [22, 0], sizes = [8, 16], strides = [1, 1]} : vector<40x16xf32> to vector<8x16xf32>
    %163 = vector.extract_strided_slice %54 {offsets = [21, 0], sizes = [1, 16], strides = [1, 1]} : vector<31x16xf32> to vector<1x16xf32>
    %164 = vector.broadcast %163 : vector<1x16xf32> to vector<8x16xf32>
    %165 = arith.mulf %162, %164 : vector<8x16xf32>
    %166 = arith.addf %161, %165 : vector<8x16xf32>
    %167 = vector.extract_strided_slice %53 {offsets = [23, 0], sizes = [8, 16], strides = [1, 1]} : vector<40x16xf32> to vector<8x16xf32>
    %168 = vector.extract_strided_slice %54 {offsets = [22, 0], sizes = [1, 16], strides = [1, 1]} : vector<31x16xf32> to vector<1x16xf32>
    %169 = vector.broadcast %168 : vector<1x16xf32> to vector<8x16xf32>
    %170 = arith.mulf %167, %169 : vector<8x16xf32>
    %171 = arith.addf %166, %170 : vector<8x16xf32>
    %172 = vector.extract_strided_slice %53 {offsets = [24, 0], sizes = [8, 16], strides = [1, 1]} : vector<40x16xf32> to vector<8x16xf32>
    %173 = vector.extract_strided_slice %54 {offsets = [23, 0], sizes = [1, 16], strides = [1, 1]} : vector<31x16xf32> to vector<1x16xf32>
    %174 = vector.broadcast %173 : vector<1x16xf32> to vector<8x16xf32>
    %175 = arith.mulf %172, %174 : vector<8x16xf32>
    %176 = arith.addf %171, %175 : vector<8x16xf32>
    %177 = vector.extract_strided_slice %53 {offsets = [25, 0], sizes = [8, 16], strides = [1, 1]} : vector<40x16xf32> to vector<8x16xf32>
    %178 = vector.extract_strided_slice %54 {offsets = [24, 0], sizes = [1, 16], strides = [1, 1]} : vector<31x16xf32> to vector<1x16xf32>
    %179 = vector.broadcast %178 : vector<1x16xf32> to vector<8x16xf32>
    %180 = arith.mulf %177, %179 : vector<8x16xf32>
    %181 = arith.addf %176, %180 : vector<8x16xf32>
    %182 = vector.extract_strided_slice %53 {offsets = [26, 0], sizes = [8, 16], strides = [1, 1]} : vector<40x16xf32> to vector<8x16xf32>
    %183 = vector.extract_strided_slice %54 {offsets = [25, 0], sizes = [1, 16], strides = [1, 1]} : vector<31x16xf32> to vector<1x16xf32>
    %184 = vector.broadcast %183 : vector<1x16xf32> to vector<8x16xf32>
    %185 = arith.mulf %182, %184 : vector<8x16xf32>
    %186 = arith.addf %181, %185 : vector<8x16xf32>
    %187 = vector.extract_strided_slice %53 {offsets = [27, 0], sizes = [8, 16], strides = [1, 1]} : vector<40x16xf32> to vector<8x16xf32>
    %188 = vector.extract_strided_slice %54 {offsets = [26, 0], sizes = [1, 16], strides = [1, 1]} : vector<31x16xf32> to vector<1x16xf32>
    %189 = vector.broadcast %188 : vector<1x16xf32> to vector<8x16xf32>
    %190 = arith.mulf %187, %189 : vector<8x16xf32>
    %191 = arith.addf %186, %190 : vector<8x16xf32>
    %192 = vector.extract_strided_slice %53 {offsets = [28, 0], sizes = [8, 16], strides = [1, 1]} : vector<40x16xf32> to vector<8x16xf32>
    %193 = vector.extract_strided_slice %54 {offsets = [27, 0], sizes = [1, 16], strides = [1, 1]} : vector<31x16xf32> to vector<1x16xf32>
    %194 = vector.broadcast %193 : vector<1x16xf32> to vector<8x16xf32>
    %195 = arith.mulf %192, %194 : vector<8x16xf32>
    %196 = arith.addf %191, %195 : vector<8x16xf32>
    %197 = vector.extract_strided_slice %53 {offsets = [29, 0], sizes = [8, 16], strides = [1, 1]} : vector<40x16xf32> to vector<8x16xf32>
    %198 = vector.extract_strided_slice %54 {offsets = [28, 0], sizes = [1, 16], strides = [1, 1]} : vector<31x16xf32> to vector<1x16xf32>
    %199 = vector.broadcast %198 : vector<1x16xf32> to vector<8x16xf32>
    %200 = arith.mulf %197, %199 : vector<8x16xf32>
    %201 = arith.addf %196, %200 : vector<8x16xf32>
    %202 = vector.extract_strided_slice %53 {offsets = [30, 0], sizes = [8, 16], strides = [1, 1]} : vector<40x16xf32> to vector<8x16xf32>
    %203 = vector.extract_strided_slice %54 {offsets = [29, 0], sizes = [1, 16], strides = [1, 1]} : vector<31x16xf32> to vector<1x16xf32>
    %204 = vector.broadcast %203 : vector<1x16xf32> to vector<8x16xf32>
    %205 = arith.mulf %202, %204 : vector<8x16xf32>
    %206 = arith.addf %201, %205 : vector<8x16xf32>
    %207 = vector.extract_strided_slice %53 {offsets = [31, 0], sizes = [8, 16], strides = [1, 1]} : vector<40x16xf32> to vector<8x16xf32>
    %208 = vector.extract_strided_slice %54 {offsets = [30, 0], sizes = [1, 16], strides = [1, 1]} : vector<31x16xf32> to vector<1x16xf32>
    %209 = vector.broadcast %208 : vector<1x16xf32> to vector<8x16xf32>
    %210 = arith.mulf %207, %209 : vector<8x16xf32>
    %211 = arith.addf %206, %210 : vector<8x16xf32>
    %212 = arith.negf %211 : vector<8x16xf32>
    %213 = math.exp %212 : vector<8x16xf32>
    %cst_28 = arith.constant 1.000000e+00 : f32
    %214 = vector.broadcast %cst_28 : f32 to vector<8x16xf32>
    %215 = arith.addf %214, %213 : vector<8x16xf32>
    %216 = arith.divf %214, %215 : vector<8x16xf32>
    %217 = arith.mulf %211, %216 : vector<8x16xf32>
    %c0_29 = arith.constant 0 : index
    %c0_30 = arith.constant 0 : index
    %218 = vector.load %arg11[%c0_29, %c0_30] : memref<16x8xf32, #tpu.memory_space<vmem>>, vector<16x8xf32>
    %cst_31 = arith.constant dense<0.000000e+00> : vector<8x8xf32>
    %219 = tpu.matmul %217, %218, %cst_31 {dimension_numbers = #tpu.dot_dimension_numbers<[1], [0], [0], [1], [0, 0, 1, 1], [], []>} : vector<8x16xf32>, vector<16x8xf32>, vector<8x8xf32> -> vector<8x8xf32>
    %c0_32 = arith.constant 0 : index
    %c0_33 = arith.constant 0 : index
    %220 = vector.load %arg12[%c0_32, %c0_33] : memref<1x8xf32, #tpu.memory_space<vmem>>, vector<1x8xf32>
    %221 = vector.broadcast %220 : vector<1x8xf32> to vector<8x8xf32>
    %222 = arith.addf %219, %221 : vector<8x8xf32>
    %c0_34 = arith.constant 0 : index
    %c0_35 = arith.constant 0 : index
    %c0_36 = arith.constant 0 : index
    %223 = vector.load %arg13[%c0_34, %c0_35, %c0_36] : memref<1x8x8xf32, #tpu.memory_space<vmem>>, vector<1x8x8xf32>
    %224 = vector.shape_cast %223 : vector<1x8x8xf32> to vector<8x8xf32>
    %225 = vector.shape_cast %222 : vector<8x8xf32> to vector<1x8x8xf32>
    tpu.vector_store %arg13[%c0_34, %c0_35, %c0_36], %225 {strides = array<i32>} : memref<1x8x8xf32, #tpu.memory_space<vmem>>, vector<1x8x8xf32>,
    return
  }
  func.func @transform_0(%arg0: i32, %arg1: i32) -> (i32, i32, i32, i32) {
    %c0_i32 = arith.constant 0 : i32
    %c0_i32_0 = arith.constant 0 : i32
    %c0_i32_1 = arith.constant 0 : i32
    return %arg0, %arg1, %c0_i32, %c0_i32_0 : i32, i32, i32, i32
  }
  func.func @transform_1(%arg0: i32, %arg1: i32) -> (i32, i32) {
    %c0_i32 = arith.constant 0 : i32
    %c0_i32_0 = arith.constant 0 : i32
    %c0_i32_1 = arith.constant 0 : i32
    return %c0_i32, %c0_i32_0 : i32, i32
  }
  func.func @transform_2(%arg0: i32, %arg1: i32) -> (i32, i32) {
    %c0_i32 = arith.constant 0 : i32
    %c0_i32_0 = arith.constant 0 : i32
    %c0_i32_1 = arith.constant 0 : i32
    return %c0_i32, %c0_i32_0 : i32, i32
  }
  func.func @transform_3(%arg0: i32, %arg1: i32) -> (i32, i32) {
    %c0_i32 = arith.constant 0 : i32
    %c0_i32_0 = arith.constant 0 : i32
    %c0_i32_1 = arith.constant 0 : i32
    return %c0_i32, %c0_i32_0 : i32, i32
  }
  func.func @transform_4(%arg0: i32, %arg1: i32) -> (i32, i32) {
    %c0_i32 = arith.constant 0 : i32
    %c0_i32_0 = arith.constant 0 : i32
    %c0_i32_1 = arith.constant 0 : i32
    return %c0_i32, %c0_i32_0 : i32, i32
  }
  func.func @transform_5(%arg0: i32, %arg1: i32) -> (i32, i32) {
    %c0_i32 = arith.constant 0 : i32
    %c0_i32_0 = arith.constant 0 : i32
    %c0_i32_1 = arith.constant 0 : i32
    return %c0_i32, %c0_i32_0 : i32, i32
  }
  func.func @transform_6(%arg0: i32, %arg1: i32) -> (i32, i32) {
    %c0_i32 = arith.constant 0 : i32
    %c0_i32_0 = arith.constant 0 : i32
    %c0_i32_1 = arith.constant 0 : i32
    return %c0_i32, %c0_i32_0 : i32, i32
  }
  func.func @transform_7(%arg0: i32, %arg1: i32) -> (i32, i32) {
    %c0_i32 = arith.constant 0 : i32
    %c0_i32_0 = arith.constant 0 : i32
    %c0_i32_1 = arith.constant 0 : i32
    return %c0_i32, %c0_i32_0 : i32, i32
  }
  func.func @transform_8(%arg0: i32, %arg1: i32) -> (i32, i32) {
    %c0_i32 = arith.constant 0 : i32
    %c0_i32_0 = arith.constant 0 : i32
    %c0_i32_1 = arith.constant 0 : i32
    return %c0_i32, %c0_i32_0 : i32, i32
  }
  func.func @transform_9(%arg0: i32, %arg1: i32) -> (i32, i32) {
    %c0_i32 = arith.constant 0 : i32
    %c0_i32_0 = arith.constant 0 : i32
    %c0_i32_1 = arith.constant 0 : i32
    return %c0_i32, %c0_i32_0 : i32, i32
  }
  func.func @transform_10(%arg0: i32, %arg1: i32) -> (i32, i32) {
    %c0_i32 = arith.constant 0 : i32
    %c0_i32_0 = arith.constant 0 : i32
    %c0_i32_1 = arith.constant 0 : i32
    return %c0_i32, %c0_i32_0 : i32, i32
  }
  func.func @transform_11(%arg0: i32, %arg1: i32) -> (i32, i32, i32) {
    %c0_i32 = arith.constant 0 : i32
    %c0_i32_0 = arith.constant 0 : i32
    return %arg0, %arg1, %c0_i32 : i32, i32, i32
  }
}

</mosaic_0001>

<llo_original>
// kernel: tpu_custom_call.1
$region0: #{tpu_custom_call.1}
  #allocation0 [shape = 'u32[]', space=smem, size = 0x4, offset = 0x4, fixed_abs, tag = 'smem constant byte address 0x4 - core index']
  #allocation1 [shape = 'u32[144,128]{1,0:T(1,128)}', space=vmem, size = 0x12000, scoped, tag = 'internal scratch']
  %s0 = inlined_call_operand.vmem [shape: f32[2,2,40,8], index: 0, kind: input, shape index: {}]
  %s1 = inlined_call_operand.vmem [shape: f32[1,8], index: 1, kind: input, shape index: {}]
  %s2 = inlined_call_operand.vmem [shape: f32[1,8], index: 2, kind: input, shape index: {}]
  %s3 = inlined_call_operand.vmem [shape: f32[8,16], index: 3, kind: input, shape index: {}]
  %s4 = inlined_call_operand.vmem [shape: f32[1,16], index: 4, kind: input, shape index: {}]
  %s5 = inlined_call_operand.vmem [shape: f32[8,16], index: 5, kind: input, shape index: {}]
  %s6 = inlined_call_operand.vmem [shape: f32[1,16], index: 6, kind: input, shape index: {}]
  %s7 = inlined_call_operand.vmem [shape: f32[31,16], index: 7, kind: input, shape index: {}]
  %s8 = inlined_call_operand.vmem [shape: f32[1,16], index: 8, kind: input, shape index: {}]
  %s9 = inlined_call_operand.vmem [shape: f32[16,8], index: 9, kind: input, shape index: {}]
  %s10 = inlined_call_operand.vmem [shape: f32[1,8], index: 10, kind: input, shape index: {}]
  %s11 = inlined_call_operand.vmem [shape: f32[2,16,8], index: 11, kind: output, shape index: {}]
  %s12 = sld [smem:[#allocation0]]
  $region77: #{tpu_custom_call.1} parent=0
    _
  %s14 = ssub.s32 1, %s12
  %s15 = scalar_select 0, %s14, %s12
  loop: start=0, step=1, limit=6
  $region2: #{tpu_custom_call.1} parent=0 // loop_pre_header
    _
  $region3: #{tpu_custom_call.1} parent=0 // loop_header
    %s17 = sphi 0, %s21
    %p18 = scmp.ge.s32.totalorder %s17, 6
    %s24 = sphi 0, %s36
    %s25 = sphi 0, %s32
    %s26 = sphi 0, %s24
    %s27 = sphi 0, %s25
    %s28 = sphi 0, %s26
    %s29 = sphi 0, %s27
    %s41 = sphi 0, %s43
    %s44 = sphi 0, %s41
    %s45 = sphi 0, %s44
    %s61 = sphi 0, %s45
    %s65 = sphi 0, %s65
    %s67 = sphi 0, %s65
    %s68 = sphi 0, %s67
    %s82 = sphi 0, %s68
    %s86 = sphi 0, %s86
    %s88 = sphi 0, %s86
    %s89 = sphi 0, %s88
    %s103 = sphi 0, %s89
    %s107 = sphi 0, %s107
    %s109 = sphi 0, %s107
    %s110 = sphi 0, %s109
    %s124 = sphi 0, %s110
    %s128 = sphi 0, %s128
    %s130 = sphi 0, %s128
    %s131 = sphi 0, %s130
    %s145 = sphi 0, %s131
    %s149 = sphi 0, %s149
    %s151 = sphi 0, %s149
    %s152 = sphi 0, %s151
    %s166 = sphi 0, %s152
    %s170 = sphi 0, %s170
    %s172 = sphi 0, %s170
    %s173 = sphi 0, %s172
    %s187 = sphi 0, %s173
    %s191 = sphi 0, %s191
    %s193 = sphi 0, %s191
    %s194 = sphi 0, %s193
    %s208 = sphi 0, %s194
    %s212 = sphi 0, %s212
    %s214 = sphi 0, %s212
    %s215 = sphi 0, %s214
    %s229 = sphi 0, %s215
    %s233 = sphi 0, %s233
    %s235 = sphi 0, %s233
    %s236 = sphi 0, %s235
    %s250 = sphi 0, %s236
    %s254 = sphi 0, %s254
    %s256 = sphi 0, %s254
    %s257 = sphi 0, %s256
    %s271 = sphi 0, %s257
    %s279 = sphi 0, %s281
    %s282 = sphi 0, %s279
    %s283 = sphi 0, %s282
    %s299 = sphi 0, %s283
  $region4: #{tpu_custom_call.1} parent=0 // loop_header_branch
    %20 = sbr.rel (%p18) target = $region8
  $region5: #{tpu_custom_call.1} parent=0 // loop_body
    %s22 = ssub.s32 %s17, 1
    %s23 = ssub.s32 %s17, 2
    %s30 = sadd.s32 1, %s25
    %p31 = scmp.ge.s32.totalorder %s30, 2
    %s32 = scalar_select %p31, 0, %s30
    %s33 = sadd.s32 1, %s24
    %s34 = scalar_select %p31, %s33, %s24
    %p35 = scmp.ge.s32.totalorder %s34, 2
    %s36 = scalar_select %p35, 0, %s34
    %s37 = ssub.s32 %s24, %s36
    %s38 = ssub.s32 %s25, %s32
    %s39 = sor.u32 %s37, %s38
    %p40 = scmp.eq.s32.totalorder %s39, 0
    %s42 = sadd.s32 %s41, 1
    %s43 = scalar_select %p40, %s41, %s42
    %p46 = pneg %p40
    %p47 = scmp.eq.s32.totalorder %s17, 3
    %p48 = por %p46, %p47
    %p49 = scmp.ne.s32.totalorder %s41, %s44
    %p50 = scmp.eq.s32.totalorder %s17, 0
    %p51 = por %p49, %p50
    %p52 = scmp.ne.s32.totalorder %s41, %s44
    %p53 = scmp.eq.s32.totalorder %s22, 3
    %p54 = por %p52, %p53
    %p55 = scmp.ne.s32.totalorder %s44, %s45
    %p56 = scmp.eq.s32.totalorder %s22, 0
    %p57 = por %p55, %p56
    %p58 = scmp.ne.s32.totalorder %s44, %s45
    %p59 = scmp.eq.s32.totalorder %s23, 3
    %p60 = por %p58, %p59
    %p62 = scmp.ne.s32.totalorder %s45, %s61
    %p63 = scmp.eq.s32.totalorder %s23, 0
    %p64 = por %p62, %p63
    %s66 = sadd.s32 %s65, 1
    %p69 = scmp.eq.s32.totalorder %s17, 3
    %p70 = scmp.ne.s32.totalorder %s65, %s67
    %p71 = scmp.eq.s32.totalorder %s17, 0
    %p72 = por %p70, %p71
    %p73 = scmp.ne.s32.totalorder %s65, %s67
    %p74 = scmp.eq.s32.totalorder %s22, 3
    %p75 = por %p73, %p74
    %p76 = scmp.ne.s32.totalorder %s67, %s68
    %p77 = scmp.eq.s32.totalorder %s22, 0
    %p78 = por %p76, %p77
    %p79 = scmp.ne.s32.totalorder %s67, %s68
    %p80 = scmp.eq.s32.totalorder %s23, 3
    %p81 = por %p79, %p80
    %p83 = scmp.ne.s32.totalorder %s68, %s82
    %p84 = scmp.eq.s32.totalorder %s23, 0
    %p85 = por %p83, %p84
    %s87 = sadd.s32 %s86, 1
    %p90 = scmp.eq.s32.totalorder %s17, 3
    %p91 = scmp.ne.s32.totalorder %s86, %s88
    %p92 = scmp.eq.s32.totalorder %s17, 0
    %p93 = por %p91, %p92
    %p94 = scmp.ne.s32.totalorder %s86, %s88
    %p95 = scmp.eq.s32.totalorder %s22, 3
    %p96 = por %p94, %p95
    %p97 = scmp.ne.s32.totalorder %s88, %s89
    %p98 = scmp.eq.s32.totalorder %s22, 0
    %p99 = por %p97, %p98
    %p100 = scmp.ne.s32.totalorder %s88, %s89
    %p101 = scmp.eq.s32.totalorder %s23, 3
    %p102 = por %p100, %p101
    %p104 = scmp.ne.s32.totalorder %s89, %s103
    %p105 = scmp.eq.s32.totalorder %s23, 0
    %p106 = por %p104, %p105
    %s108 = sadd.s32 %s107, 1
    %p111 = scmp.eq.s32.totalorder %s17, 3
    %p112 = scmp.ne.s32.totalorder %s107, %s109
    %p113 = scmp.eq.s32.totalorder %s17, 0
    %p114 = por %p112, %p113
    %p115 = scmp.ne.s32.totalorder %s107, %s109
    %p116 = scmp.eq.s32.totalorder %s22, 3
    %p117 = por %p115, %p116
    %p118 = scmp.ne.s32.totalorder %s109, %s110
    %p119 = scmp.eq.s32.totalorder %s22, 0
    %p120 = por %p118, %p119
    %p121 = scmp.ne.s32.totalorder %s109, %s110
    %p122 = scmp.eq.s32.totalorder %s23, 3
    %p123 = por %p121, %p122
    %p125 = scmp.ne.s32.totalorder %s110, %s124
    %p126 = scmp.eq.s32.totalorder %s23, 0
    %p127 = por %p125, %p126
    %s129 = sadd.s32 %s128, 1
    %p132 = scmp.eq.s32.totalorder %s17, 3
    %p133 = scmp.ne.s32.totalorder %s128, %s130
    %p134 = scmp.eq.s32.totalorder %s17, 0
    %p135 = por %p133, %p134
    %p136 = scmp.ne.s32.totalorder %s128, %s130
    %p137 = scmp.eq.s32.totalorder %s22, 3
    %p138 = por %p136, %p137
    %p139 = scmp.ne.s32.totalorder %s130, %s131
    %p140 = scmp.eq.s32.totalorder %s22, 0
    %p141 = por %p139, %p140
    %p142 = scmp.ne.s32.totalorder %s130, %s131
    %p143 = scmp.eq.s32.totalorder %s23, 3
    %p144 = por %p142, %p143
    %p146 = scmp.ne.s32.totalorder %s131, %s145
    %p147 = scmp.eq.s32.totalorder %s23, 0
    %p148 = por %p146, %p147
    %s150 = sadd.s32 %s149, 1
    %p153 = scmp.eq.s32.totalorder %s17, 3
    %p154 = scmp.ne.s32.totalorder %s149, %s151
    %p155 = scmp.eq.s32.totalorder %s17, 0
    %p156 = por %p154, %p155
    %p157 = scmp.ne.s32.totalorder %s149, %s151
    %p158 = scmp.eq.s32.totalorder %s22, 3
    %p159 = por %p157, %p158
    %p160 = scmp.ne.s32.totalorder %s151, %s152
    %p161 = scmp.eq.s32.totalorder %s22, 0
    %p162 = por %p160, %p161
    %p163 = scmp.ne.s32.totalorder %s151, %s152
    %p164 = scmp.eq.s32.totalorder %s23, 3
    %p165 = por %p163, %p164
    %p167 = scmp.ne.s32.totalorder %s152, %s166
    %p168 = scmp.eq.s32.totalorder %s23, 0
    %p169 = por %p167, %p168
    %s171 = sadd.s32 %s170, 1
    %p174 = scmp.eq.s32.totalorder %s17, 3
    %p175 = scmp.ne.s32.totalorder %s170, %s172
    %p176 = scmp.eq.s32.totalorder %s17, 0
    %p177 = por %p175, %p176
    %p178 = scmp.ne.s32.totalorder %s170, %s172
    %p179 = scmp.eq.s32.totalorder %s22, 3
    %p180 = por %p178, %p179
    %p181 = scmp.ne.s32.totalorder %s172, %s173
    %p182 = scmp.eq.s32.totalorder %s22, 0
    %p183 = por %p181, %p182
    %p184 = scmp.ne.s32.totalorder %s172, %s173
    %p185 = scmp.eq.s32.totalorder %s23, 3
    %p186 = por %p184, %p185
    %p188 = scmp.ne.s32.totalorder %s173, %s187
    %p189 = scmp.eq.s32.totalorder %s23, 0
    %p190 = por %p188, %p189
    %s192 = sadd.s32 %s191, 1
    %p195 = scmp.eq.s32.totalorder %s17, 3
    %p196 = scmp.ne.s32.totalorder %s191, %s193
    %p197 = scmp.eq.s32.totalorder %s17, 0
    %p198 = por %p196, %p197
    %p199 = scmp.ne.s32.totalorder %s191, %s193
    %p200 = scmp.eq.s32.totalorder %s22, 3
    %p201 = por %p199, %p200
    %p202 = scmp.ne.s32.totalorder %s193, %s194
    %p203 = scmp.eq.s32.totalorder %s22, 0
    %p204 = por %p202, %p203
    %p205 = scmp.ne.s32.totalorder %s193, %s194
    %p206 = scmp.eq.s32.totalorder %s23, 3
    %p207 = por %p205, %p206
    %p209 = scmp.ne.s32.totalorder %s194, %s208
    %p210 = scmp.eq.s32.totalorder %s23, 0
    %p211 = por %p209, %p210
    %s213 = sadd.s32 %s212, 1
    %p216 = scmp.eq.s32.totalorder %s17, 3
    %p217 = scmp.ne.s32.totalorder %s212, %s214
    %p218 = scmp.eq.s32.totalorder %s17, 0
    %p219 = por %p217, %p218
    %p220 = scmp.ne.s32.totalorder %s212, %s214
    %p221 = scmp.eq.s32.totalorder %s22, 3
    %p222 = por %p220, %p221
    %p223 = scmp.ne.s32.totalorder %s214, %s215
    %p224 = scmp.eq.s32.totalorder %s22, 0
    %p225 = por %p223, %p224
    %p226 = scmp.ne.s32.totalorder %s214, %s215
    %p227 = scmp.eq.s32.totalorder %s23, 3
    %p228 = por %p226, %p227
    %p230 = scmp.ne.s32.totalorder %s215, %s229
    %p231 = scmp.eq.s32.totalorder %s23, 0
    %p232 = por %p230, %p231
    %s234 = sadd.s32 %s233, 1
    %p237 = scmp.eq.s32.totalorder %s17, 3
    %p238 = scmp.ne.s32.totalorder %s233, %s235
    %p239 = scmp.eq.s32.totalorder %s17, 0
    %p240 = por %p238, %p239
    %p241 = scmp.ne.s32.totalorder %s233, %s235
    %p242 = scmp.eq.s32.totalorder %s22, 3
    %p243 = por %p241, %p242
    %p244 = scmp.ne.s32.totalorder %s235, %s236
    %p245 = scmp.eq.s32.totalorder %s22, 0
    %p246 = por %p244, %p245
    %p247 = scmp.ne.s32.totalorder %s235, %s236
    %p248 = scmp.eq.s32.totalorder %s23, 3
    %p249 = por %p247, %p248
    %p251 = scmp.ne.s32.totalorder %s236, %s250
    %p252 = scmp.eq.s32.totalorder %s23, 0
    %p253 = por %p251, %p252
    %s255 = sadd.s32 %s254, 1
    %p258 = scmp.eq.s32.totalorder %s17, 3
    %p259 = scmp.ne.s32.totalorder %s254, %s256
    %p260 = scmp.eq.s32.totalorder %s17, 0
    %p261 = por %p259, %p260
    %p262 = scmp.ne.s32.totalorder %s254, %s256
    %p263 = scmp.eq.s32.totalorder %s22, 3
    %p264 = por %p262, %p263
    %p265 = scmp.ne.s32.totalorder %s256, %s257
    %p266 = scmp.eq.s32.totalorder %s22, 0
    %p267 = por %p265, %p266
    %p268 = scmp.ne.s32.totalorder %s256, %s257
    %p269 = scmp.eq.s32.totalorder %s23, 3
    %p270 = por %p268, %p269
    %p272 = scmp.ne.s32.totalorder %s257, %s271
    %p273 = scmp.eq.s32.totalorder %s23, 0
    %p274 = por %p272, %p273
    %s275 = ssub.s32 %s24, %s36
    %s276 = ssub.s32 %s25, %s32
    %s277 = sor.u32 %s275, %s276
    %p278 = scmp.eq.s32.totalorder %s277, 0
    %s280 = sadd.s32 %s279, 1
    %s281 = scalar_select %p278, %s279, %s280
    %p284 = pneg %p278
    %p285 = scmp.eq.s32.totalorder %s17, 3
    %p286 = por %p284, %p285
    %p287 = scmp.ne.s32.totalorder %s279, %s282
    %p288 = scmp.eq.s32.totalorder %s17, 0
    %p289 = por %p287, %p288
    %p290 = scmp.ne.s32.totalorder %s279, %s282
    %p291 = scmp.eq.s32.totalorder %s22, 3
    %p292 = por %p290, %p291
    %p293 = scmp.ne.s32.totalorder %s282, %s283
    %p294 = scmp.eq.s32.totalorder %s22, 0
    %p295 = por %p293, %p294
    %p296 = scmp.ne.s32.totalorder %s282, %s283
    %p297 = scmp.eq.s32.totalorder %s23, 3
    %p298 = por %p296, %p297
    %p300 = scmp.ne.s32.totalorder %s283, %s299
    %p301 = scmp.eq.s32.totalorder %s23, 0
    %p302 = por %p300, %p301
    %p303 = scmp.le.s32.totalorder 1, %s17
    %p304 = scmp.lt.s32.totalorder %s17, 5
    %p305 = pnand %p303, %p304
    %p306 = pneg %p305
    // Predicated region
    $region9: #{tpu_custom_call.1} parent=5 // pred_check
      _
    $region10: #{tpu_custom_call.1} parent=5 // pred_check_branch
      %308 = sbr.rel (%p305) target = $region12
    $region11: #{tpu_custom_call.1} parent=5 // pred_region
      %s309 = ssub.s32 %s17, 1
      // Predicated region
      $region13: #{tpu_custom_call.1} parent=11 // pred_check
        %p310 = pneg %p78
      $region14: #{tpu_custom_call.1} parent=11 // pred_check_branch
        %312 = sbr.rel (%p310) target = $region16
      $region15: #{tpu_custom_call.1} parent=11 // pred_region
        _
      $region16: #{tpu_custom_call.1} parent=11 // pred_fallthru
        _
      // Predicated region
      $region17: #{tpu_custom_call.1} parent=11 // pred_check
        %p313 = pneg %p99
      $region18: #{tpu_custom_call.1} parent=11 // pred_check_branch
        %315 = sbr.rel (%p313) target = $region20
      $region19: #{tpu_custom_call.1} parent=11 // pred_region
        _
      $region20: #{tpu_custom_call.1} parent=11 // pred_fallthru
        _
      // Predicated region
      $region21: #{tpu_custom_call.1} parent=11 // pred_check
        %p316 = pneg %p120
      $region22: #{tpu_custom_call.1} parent=11 // pred_check_branch
        %318 = sbr.rel (%p316) target = $region24
      $region23: #{tpu_custom_call.1} parent=11 // pred_region
        _
      $region24: #{tpu_custom_call.1} parent=11 // pred_fallthru
        _
      // Predicated region
      $region25: #{tpu_custom_call.1} parent=11 // pred_check
        %p319 = pneg %p141
      $region26: #{tpu_custom_call.1} parent=11 // pred_check_branch
        %321 = sbr.rel (%p319) target = $region28
      $region27: #{tpu_custom_call.1} parent=11 // pred_region
        _
      $region28: #{tpu_custom_call.1} parent=11 // pred_fallthru
        _
      // Predicated region
      $region29: #{tpu_custom_call.1} parent=11 // pred_check
        %p322 = pneg %p162
      $region30: #{tpu_custom_call.1} parent=11 // pred_check_branch
        %324 = sbr.rel (%p322) target = $region32
      $region31: #{tpu_custom_call.1} parent=11 // pred_region
        _
      $region32: #{tpu_custom_call.1} parent=11 // pred_fallthru
        _
      // Predicated region
      $region33: #{tpu_custom_call.1} parent=11 // pred_check
        %p325 = pneg %p183
      $region34: #{tpu_custom_call.1} parent=11 // pred_check_branch
        %327 = sbr.rel (%p325) target = $region36
      $region35: #{tpu_custom_call.1} parent=11 // pred_region
        _
      $region36: #{tpu_custom_call.1} parent=11 // pred_fallthru
        _
      // Predicated region
      $region37: #{tpu_custom_call.1} parent=11 // pred_check
        %p328 = pneg %p204
      $region38: #{tpu_custom_call.1} parent=11 // pred_check_branch
        %330 = sbr.rel (%p328) target = $region40
      $region39: #{tpu_custom_call.1} parent=11 // pred_region
        _
      $region40: #{tpu_custom_call.1} parent=11 // pred_fallthru
        _
      // Predicated region
      $region41: #{tpu_custom_call.1} parent=11 // pred_check
        %p331 = pneg %p225
      $region42: #{tpu_custom_call.1} parent=11 // pred_check_branch
        %333 = sbr.rel (%p331) target = $region44
      $region43: #{tpu_custom_call.1} parent=11 // pred_region
        _
      $region44: #{tpu_custom_call.1} parent=11 // pred_fallthru
        _
      // Predicated region
      $region45: #{tpu_custom_call.1} parent=11 // pred_check
        %p334 = pneg %p246
      $region46: #{tpu_custom_call.1} parent=11 // pred_check_branch
        %336 = sbr.rel (%p334) target = $region48
      $region47: #{tpu_custom_call.1} parent=11 // pred_region
        _
      $region48: #{tpu_custom_call.1} parent=11 // pred_fallthru
        _
      // Predicated region
      $region49: #{tpu_custom_call.1} parent=11 // pred_check
        %p337 = pneg %p267
      $region50: #{tpu_custom_call.1} parent=11 // pred_check_branch
        %339 = sbr.rel (%p337) target = $region52
      $region51: #{tpu_custom_call.1} parent=11 // pred_region
        _
      $region52: #{tpu_custom_call.1} parent=11 // pred_fallthru
        _
    $region12: #{tpu_custom_call.1} parent=5 // pred_fallthru
      _
    %p340 = scmp.lt.s32.totalorder %s17, 4
    // Predicated region
    $region53: #{tpu_custom_call.1} parent=5 // pred_check
      %p341 = pneg %p340
    $region54: #{tpu_custom_call.1} parent=5 // pred_check_branch
      %343 = sbr.rel (%p341) target = $region56
    $region55: #{tpu_custom_call.1} parent=5 // pred_region
      // Predicated region
      $region57: #{tpu_custom_call.1} parent=55 // pred_check
        %p344 = pneg %p51
      $region58: #{tpu_custom_call.1} parent=55 // pred_check_branch
        %346 = sbr.rel (%p344) target = $region60
      $region59: #{tpu_custom_call.1} parent=55 // pred_region
        %p347 = scmp.lt.s32.totalorder %s24, 1
        %s348 = scalar_select %p347, %s24, 1
        %p349 = scmp.lt.s32.totalorder %s25, 1
        %s350 = scalar_select %p349, %s25, 1
        %s351 = smul.addr %s350, 5
        %s352 = smul.addr %s348, 10
        %s353 = sadd.s32 %s351, %s352
        %s354 = smul.addr %s353, 8
        %s355 = scalar_lea.vmem %s0, %s354
      $region60: #{tpu_custom_call.1} parent=55 // pred_fallthru
        _
    $region56: #{tpu_custom_call.1} parent=5 // pred_fallthru
      _
    %p356 = scmp.le.s32.totalorder 1, %s17
    %p357 = scmp.lt.s32.totalorder %s17, 5
    %p358 = pnand %p356, %p357
    %p359 = pneg %p358
    // Predicated region
    $region61: #{tpu_custom_call.1} parent=5 // pred_check
      _
    $region62: #{tpu_custom_call.1} parent=5 // pred_check_branch
      %361 = sbr.rel (%p358) target = $region64
    $region63: #{tpu_custom_call.1} parent=5 // pred_region
      %s362 = ssub.s32 %s17, 1
      %p363 = scmp.lt.s32.totalorder %s26, 1
      %s364 = scalar_select %p363, %s26, 1
      %p365 = scmp.lt.s32.totalorder %s27, 1
      %s366 = scalar_select %p365, %s27, 1
      %s367 = smul.addr %s366, 5
      %s368 = smul.addr %s364, 10
      %s369 = sadd.s32 %s367, %s368
      %s370 = smul.addr %s369, 8
      %s371 = scalar_lea.vmem %s0, %s370
      %p372 = pneg %p57
      %p373 = pneg %p54
      %p374 = pneg %p78
      %p375 = pneg %p75
      %p376 = pneg %p99
      %p377 = pneg %p96
      %p378 = pneg %p120
      %p379 = pneg %p117
      %p380 = pneg %p141
      %p381 = pneg %p138
      %p382 = pneg %p162
      %p383 = pneg %p159
      %p384 = pneg %p183
      %p385 = pneg %p180
      %p386 = pneg %p204
      %p387 = pneg %p201
      %p388 = pneg %p225
      %p389 = pneg %p222
      %p390 = pneg %p246
      %p391 = pneg %p243
      %p392 = pneg %p267
      %p393 = pneg %p264
      %p394 = pneg %p295
      %p395 = pneg %p292
      %p396 = scmp.lt.s32.totalorder %s26, 1
      %s397 = scalar_select %p396, %s26, 1
      %p398 = scmp.lt.s32.totalorder %s27, 1
      %s399 = scalar_select %p398, %s27, 1
      %s400 = smul.addr %s397, 2
      %s401 = sadd.s32 %s399, %s400
      %s402 = smul.addr %s401, 8
      %s403 = scalar_lea.vmem %s11, %s402
      %p404 = scmp.lt.s32.totalorder %s26, 1
      %s405 = scalar_select %p404, %s26, 1
      %p406 = scmp.lt.s32.totalorder %s27, 1
      %s407 = scalar_select %p406, %s27, 1
      %s408 = smul.addr %s407, 5
      %s409 = smul.addr %s405, 10
      %s410 = sadd.s32 %s408, %s409
      %s411 = smul.addr %s410, 8
      %s412 = scalar_lea.vmem %s0, %s411
      %p413 = scmp.lt.s32.totalorder %s26, 1
      %s414 = scalar_select %p413, %s26, 1
      %p415 = scmp.lt.s32.totalorder %s27, 1
      %s416 = scalar_select %p415, %s27, 1
      %s417 = smul.addr %s414, 2
      %s418 = sadd.s32 %s416, %s417
      %s419 = smul.addr %s418, 8
      %s420 = scalar_lea.vmem %s11, %s419
      %v421 = vld [vmem:[%s412] sm:$0xff]
      %v422 = vld [vmem:[%s412 + $0x8] sm:$0xff]
      %v423 = vld [vmem:[%s412 + $0x10] sm:$0xff]
      %v424 = vld [vmem:[%s412 + $0x18] sm:$0xff]
      %v425 = vld [vmem:[%s412 + $0x20] sm:$0xff]
      %vm426 = vcmask 64512
      %v427 = vsel %vm426, %v421, 0.0
      %428 = vadd.xlane.f32.xlu0 %v427
      %v429 = vpop.xlane.xlu0 %428
      %v430 = vsel %vm426, %v422, 0.0
      %431 = vadd.xlane.f32.xlu0 %v430
      %v432 = vpop.xlane.xlu0 %431
      %v433 = vsel %vm426, %v423, 0.0
      %434 = vadd.xlane.f32.xlu0 %v433
      %v435 = vpop.xlane.xlu0 %434
      %v436 = vsel %vm426, %v424, 0.0
      %437 = vadd.xlane.f32.xlu0 %v436
      %v438 = vpop.xlane.xlu0 %437
      %v439 = vsel %vm426, %v425, 0.0
      %440 = vadd.xlane.f32.xlu0 %v439
      %v441 = vpop.xlane.xlu0 %440
      %v442 = vrcp.pop 8.0
      %v443 = vmul.f32 %v429, %v442
      %v444 = vmul.f32 %v432, %v442
      %v445 = vmul.f32 %v435, %v442
      %v446 = vmul.f32 %v438, %v442
      %v447 = vmul.f32 %v441, %v442
      %v448 = vsub.f32 %v421, %v443
      %v449 = vsub.f32 %v422, %v444
      %v450 = vsub.f32 %v423, %v445
      %v451 = vsub.f32 %v424, %v446
      %v452 = vsub.f32 %v425, %v447
      %v453 = vmul.f32 %v448, %v448
      %v454 = vmul.f32 %v449, %v449
      %v455 = vmul.f32 %v450, %v450
      %v456 = vmul.f32 %v451, %v451
      %v457 = vmul.f32 %v452, %v452
      %v458 = vsel %vm426, %v453, 0.0
      %459 = vadd.xlane.f32.xlu0 %v458
      %v460 = vpop.xlane.xlu0 %459
      %v461 = vsel %vm426, %v454, 0.0
      %462 = vadd.xlane.f32.xlu0 %v461
      %v463 = vpop.xlane.xlu0 %462
      %v464 = vsel %vm426, %v455, 0.0
      %465 = vadd.xlane.f32.xlu0 %v464
      %v466 = vpop.xlane.xlu0 %465
      %v467 = vsel %vm426, %v456, 0.0
      %468 = vadd.xlane.f32.xlu0 %v467
      %v469 = vpop.xlane.xlu0 %468
      %v470 = vsel %vm426, %v457, 0.0
      %471 = vadd.xlane.f32.xlu0 %v470
      %v472 = vpop.xlane.xlu0 %471
      %v473 = vmul.f32 %v460, %v442
      %v474 = vmul.f32 %v463, %v442
      %v475 = vmul.f32 %v466, %v442
      %v476 = vmul.f32 %v469, %v442
      %v477 = vmul.f32 %v472, %v442
      %v478 = vadd.f32 %v473, 1e-05
      %v479 = vadd.f32 %v474, 1e-05
      %v480 = vadd.f32 %v475, 1e-05
      %v481 = vadd.f32 %v476, 1e-05
      %v482 = vadd.f32 %v477, 1e-05
      %v483 = vrsqrt.pop %v478
      %v484 = vrsqrt.pop %v479
      %v485 = vrsqrt.pop %v480
      %v486 = vrsqrt.pop %v481
      %v487 = vrsqrt.pop %v482
      %v488 = vmul.f32 %v448, %v483
      %v489 = vmul.f32 %v449, %v484
      %v490 = vmul.f32 %v450, %v485
      %v491 = vmul.f32 %v451, %v486
      %v492 = vmul.f32 %v452, %v487
      %v493 = vld [vmem:[%s1] sm:$0x1]
      %v495 = vlaneseq
      %v496 = vshrl.u32 %v495, 7
      %v497 = vsub.s32 0, %v496
      %v498 = vrot.slane %v493, %v497
      %v500 = vmul.f32 %v488, %v498
      %v501 = vmul.f32 %v489, %v498
      %v502 = vmul.f32 %v490, %v498
      %v503 = vmul.f32 %v491, %v498
      %v504 = vmul.f32 %v492, %v498
      %v505 = vld [vmem:[%s2] sm:$0x1]
      %v507 = vlaneseq
      %v508 = vshrl.u32 %v507, 7
      %v509 = vsub.s32 0, %v508
      %v510 = vrot.slane %v505, %v509
      %v512 = vadd.f32 %v500, %v510
      %v513 = vadd.f32 %v501, %v510
      %v514 = vadd.f32 %v502, %v510
      %v515 = vadd.f32 %v503, %v510
      %v516 = vadd.f32 %v504, %v510
      %v517 = vld [vmem:[%s3] sm:$0xff]
      %v518 = vld [vmem:[%s4] sm:$0x1]
      %v520 = vlaneseq
      %v521 = vshrl.u32 %v520, 7
      %v522 = vsub.s32 0, %v521
      %v523 = vrot.slane %v518, %v522
      %v526 = vsel %vm426, %v512, 0
      %v529 = vsel %vm426, %v513, 0
      %v532 = vsel %vm426, %v514, 0
      %v535 = vsel %vm426, %v515, 0
      %v538 = vsel %vm426, %v516, 0
      %540 = vmatprep.subr.mxu0 0.0
      %541 = vmatpush1.msra.mxu0 0.0
      %542 = vmatprep.subr.mxu0 0.0
      %543 = vmatpush1.msra.mxu0 0.0
      %544 = vmatprep.subr.mxu0 0.0
      %545 = vmatpush1.msra.mxu0 0.0
      %546 = vmatprep.subr.mxu0 0.0
      %547 = vmatpush1.msra.mxu0 0.0
      %548 = vmatprep.subr.mxu0 0.0
      %549 = vmatpush1.msra.mxu0 0.0
      %550 = vmatprep.subr.mxu0 0.0
      %551 = vmatpush1.msra.mxu0 0.0
      %552 = vmatprep.subr.mxu0 0.0
      %553 = vmatpush1.msra.mxu0 0.0
      %554 = vmatprep.subr.mxu0 0.0
      %555 = vmatpush1.msra.mxu0 0.0
      %556 = vmatprep.subr.mxu0 0.0
      %557 = vmatpush1.msra.mxu0 0.0
      %558 = vmatprep.subr.mxu0 0.0
      %559 = vmatpush1.msra.mxu0 0.0
      %560 = vmatprep.subr.mxu0 0.0
      %561 = vmatpush1.msra.mxu0 0.0
      %562 = vmatprep.subr.mxu0 0.0
      %563 = vmatpush1.msra.mxu0 0.0
      %564 = vmatprep.subr.mxu0 0.0
      %565 = vmatpush1.msra.mxu0 0.0
      %566 = vmatprep.subr.mxu0 0.0
      %567 = vmatpush1.msra.mxu0 0.0
      %568 = vmatprep.subr.mxu0 0.0
      %569 = vmatpush1.msra.mxu0 0.0
      %570 = vmatprep.subr.mxu0 0.0
      %571 = vmatpush1.msra.mxu0 %v517
      %572 = vmatprep.subr.mxu0 0.0
      %573 = vmatpush2.msra.mxu0 0.0
      %574 = vmatprep.subr.mxu0 0.0
      %575 = vmatpush2.msra.mxu0 0.0
      %576 = vmatprep.subr.mxu0 0.0
      %577 = vmatpush2.msra.mxu0 0.0
      %578 = vmatprep.subr.mxu0 0.0
      %579 = vmatpush2.msra.mxu0 0.0
      %580 = vmatprep.subr.mxu0 0.0
      %581 = vmatpush2.msra.mxu0 0.0
      %582 = vmatprep.subr.mxu0 0.0
      %583 = vmatpush2.msra.mxu0 0.0
      %584 = vmatprep.subr.mxu0 0.0
      %585 = vmatpush2.msra.mxu0 0.0
      %586 = vmatprep.subr.mxu0 0.0
      %587 = vmatpush2.msra.mxu0 0.0
      %588 = vmatprep.subr.mxu0 0.0
      %589 = vmatpush2.msra.mxu0 0.0
      %590 = vmatprep.subr.mxu0 0.0
      %591 = vmatpush2.msra.mxu0 0.0
      %592 = vmatprep.subr.mxu0 0.0
      %593 = vmatpush2.msra.mxu0 0.0
      %594 = vmatprep.subr.mxu0 0.0
      %595 = vmatpush2.msra.mxu0 0.0
      %596 = vmatprep.subr.mxu0 0.0
      %597 = vmatpush2.msra.mxu0 0.0
      %598 = vmatprep.subr.mxu0 0.0
      %599 = vmatpush2.msra.mxu0 0.0
      %600 = vmatprep.subr.mxu0 0.0
      %601 = vmatpush2.msra.mxu0 0.0
      %602 = vmatprep.subr.mxu0 0.0
      %603 = vmatpush2.msra.mxu0 0.0
      %604 = vmatprep.mubr.f32.mxu0 0.0
      %605 = vmatmul.mubr.f32.gmra.mxu0 %v526
      %v606 = vpop.f32.mrf.mxu0
      %v607 = vadd.f32 %v523, %v606
      %v608 = vpop.f32.mrf.mxu0
      %609 = vmatprep.mubr.f32.mxu0 0.0
      %610 = vmatmul.mubr.f32.gmra.mxu0 %v529
      %v611 = vpop.f32.mrf.mxu0
      %v612 = vadd.f32 %v523, %v611
      %v613 = vpop.f32.mrf.mxu0
      %614 = vmatprep.mubr.f32.mxu0 0.0
      %615 = vmatmul.mubr.f32.gmra.mxu0 %v532
      %v616 = vpop.f32.mrf.mxu0
      %v617 = vadd.f32 %v523, %v616
      %v618 = vpop.f32.mrf.mxu0
      %619 = vmatprep.mubr.f32.mxu0 0.0
      %620 = vmatmul.mubr.f32.gmra.mxu0 %v535
      %v621 = vpop.f32.mrf.mxu0
      %v622 = vadd.f32 %v523, %v621
      %v623 = vpop.f32.mrf.mxu0
      %624 = vmatprep.mubr.f32.mxu0 0.0
      %625 = vmatmul.mubr.f32.gmra.mxu0 %v538
      %v626 = vpop.f32.mrf.mxu0
      %v627 = vadd.f32 %v523, %v626
      %v628 = vpop.f32.mrf.mxu0
      %629 = vdwg.mxu0
      %v630 = vld [vmem:[%s5] sm:$0xff]
      %v631 = vld [vmem:[%s6] sm:$0x1]
      %v633 = vlaneseq
      %v634 = vshrl.u32 %v633, 7
      %v635 = vsub.s32 0, %v634
      %v636 = vrot.slane %v631, %v635
      %638 = vmatprep.subr.mxu0 0.0
      %639 = vmatpush1.msra.mxu0 0.0
      %640 = vmatprep.subr.mxu0 0.0
      %641 = vmatpush1.msra.mxu0 0.0
      %642 = vmatprep.subr.mxu0 0.0
      %643 = vmatpush1.msra.mxu0 0.0
      %644 = vmatprep.subr.mxu0 0.0
      %645 = vmatpush1.msra.mxu0 0.0
      %646 = vmatprep.subr.mxu0 0.0
      %647 = vmatpush1.msra.mxu0 0.0
      %648 = vmatprep.subr.mxu0 0.0
      %649 = vmatpush1.msra.mxu0 0.0
      %650 = vmatprep.subr.mxu0 0.0
      %651 = vmatpush1.msra.mxu0 0.0
      %652 = vmatprep.subr.mxu0 0.0
      %653 = vmatpush1.msra.mxu0 0.0
      %654 = vmatprep.subr.mxu0 0.0
      %655 = vmatpush1.msra.mxu0 0.0
      %656 = vmatprep.subr.mxu0 0.0
      %657 = vmatpush1.msra.mxu0 0.0
      %658 = vmatprep.subr.mxu0 0.0
      %659 = vmatpush1.msra.mxu0 0.0
      %660 = vmatprep.subr.mxu0 0.0
      %661 = vmatpush1.msra.mxu0 0.0
      %662 = vmatprep.subr.mxu0 0.0
      %663 = vmatpush1.msra.mxu0 0.0
      %664 = vmatprep.subr.mxu0 0.0
      %665 = vmatpush1.msra.mxu0 0.0
      %666 = vmatprep.subr.mxu0 0.0
      %667 = vmatpush1.msra.mxu0 0.0
      %668 = vmatprep.subr.mxu0 0.0
      %669 = vmatpush1.msra.mxu0 %v630
      %670 = vmatprep.subr.mxu0 0.0
      %671 = vmatpush2.msra.mxu0 0.0
      %672 = vmatprep.subr.mxu0 0.0
      %673 = vmatpush2.msra.mxu0 0.0
      %674 = vmatprep.subr.mxu0 0.0
      %675 = vmatpush2.msra.mxu0 0.0
      %676 = vmatprep.subr.mxu0 0.0
      %677 = vmatpush2.msra.mxu0 0.0
      %678 = vmatprep.subr.mxu0 0.0
      %679 = vmatpush2.msra.mxu0 0.0
      %680 = vmatprep.subr.mxu0 0.0
      %681 = vmatpush2.msra.mxu0 0.0
      %682 = vmatprep.subr.mxu0 0.0
      %683 = vmatpush2.msra.mxu0 0.0
      %684 = vmatprep.subr.mxu0 0.0
      %685 = vmatpush2.msra.mxu0 0.0
      %686 = vmatprep.subr.mxu0 0.0
      %687 = vmatpush2.msra.mxu0 0.0
      %688 = vmatprep.subr.mxu0 0.0
      %689 = vmatpush2.msra.mxu0 0.0
      %690 = vmatprep.subr.mxu0 0.0
      %691 = vmatpush2.msra.mxu0 0.0
      %692 = vmatprep.subr.mxu0 0.0
      %693 = vmatpush2.msra.mxu0 0.0
      %694 = vmatprep.subr.mxu0 0.0
      %695 = vmatpush2.msra.mxu0 0.0
      %696 = vmatprep.subr.mxu0 0.0
      %697 = vmatpush2.msra.mxu0 0.0
      %698 = vmatprep.subr.mxu0 0.0
      %699 = vmatpush2.msra.mxu0 0.0
      %700 = vmatprep.subr.mxu0 0.0
      %701 = vmatpush2.msra.mxu0 0.0
      %702 = vmatprep.mubr.f32.mxu0 0.0
      %703 = vmatmul.mubr.f32.gmra.mxu0 %v526
      %v704 = vpop.f32.mrf.mxu0
      %v705 = vadd.f32 %v636, %v704
      %v706 = vpop.f32.mrf.mxu0
      %707 = vmatprep.mubr.f32.mxu0 0.0
      %708 = vmatmul.mubr.f32.gmra.mxu0 %v529
      %v709 = vpop.f32.mrf.mxu0
      %v710 = vadd.f32 %v636, %v709
      %v711 = vpop.f32.mrf.mxu0
      %712 = vmatprep.mubr.f32.mxu0 0.0
      %713 = vmatmul.mubr.f32.gmra.mxu0 %v532
      %v714 = vpop.f32.mrf.mxu0
      %v715 = vadd.f32 %v636, %v714
      %v716 = vpop.f32.mrf.mxu0
      %717 = vmatprep.mubr.f32.mxu0 0.0
      %718 = vmatmul.mubr.f32.gmra.mxu0 %v535
      %v719 = vpop.f32.mrf.mxu0
      %v720 = vadd.f32 %v636, %v719
      %v721 = vpop.f32.mrf.mxu0
      %722 = vmatprep.mubr.f32.mxu0 0.0
      %723 = vmatmul.mubr.f32.gmra.mxu0 %v538
      %v724 = vpop.f32.mrf.mxu0
      %v725 = vadd.f32 %v636, %v724
      %v726 = vpop.f32.mrf.mxu0
      %727 = vdwg.mxu0
      %v728 = vxor.u32 %v705, 2147483648
      %v729 = vxor.u32 %v710, 2147483648
      %v730 = vxor.u32 %v715, 2147483648
      %v731 = vxor.u32 %v720, 2147483648
      %v732 = vxor.u32 %v725, 2147483648
      %v733 = vmul.f32 %v728, 1.442695
      %v734 = vpow.pop %v733
      %v735 = vmul.f32 %v729, 1.442695
      %v736 = vpow.pop %v735
      %v737 = vmul.f32 %v730, 1.442695
      %v738 = vpow.pop %v737
      %v739 = vmul.f32 %v731, 1.442695
      %v740 = vpow.pop %v739
      %v741 = vmul.f32 %v732, 1.442695
      %v742 = vpow.pop %v741
      %v743 = vadd.f32 %v734, 1.0
      %v744 = vadd.f32 %v736, 1.0
      %v745 = vadd.f32 %v738, 1.0
      %v746 = vadd.f32 %v740, 1.0
      %v747 = vadd.f32 %v742, 1.0
      %v748 = vrcp.pop %v743
      %v749 = vmul.f32 1.0, %v748
      %v750 = vrcp.pop %v744
      %v751 = vmul.f32 1.0, %v750
      %v752 = vrcp.pop %v745
      %v753 = vmul.f32 1.0, %v752
      %v754 = vrcp.pop %v746
      %v755 = vmul.f32 1.0, %v754
      %v756 = vrcp.pop %v747
      %v757 = vmul.f32 1.0, %v756
      %v758 = vmul.f32 %v607, %v749
      %v759 = vmul.f32 %v612, %v751
      %v760 = vmul.f32 %v617, %v753
      %v761 = vmul.f32 %v622, %v755
      %v762 = vmul.f32 %v627, %v757
      %v763 = vlaneseq
      %v764 = vshrl.u32 %v763, 7
      %v765 = vadd.s32 %v764, 8
      %v766 = vadd.s32 %v764, 16
      %v767 = vadd.s32 %v764, 24
      %v768 = vadd.s32 %v764, 32
      %s769 = smul.u32 %s27, 8
      %s770 = ssub.s32 %s769, 16
      %v771 = vstv %s770
      %v772 = vadd.s32 %v771, %v764
      %v773 = vadd.s32 %v771, %v765
      %v774 = vadd.s32 %v771, %v766
      %v775 = vadd.s32 %v771, %v767
      %v776 = vadd.s32 %v771, %v768
      %vm777 = vcmp.ge.s32.totalorder %v772, 0
      %vm778 = vcmp.ge.s32.totalorder %v773, 0
      %vm779 = vcmp.ge.s32.totalorder %v774, 0
      %vm780 = vcmp.ge.s32.totalorder %v775, 0
      %vm781 = vcmp.ge.s32.totalorder %v776, 0
      %vm782 = vcmp.lt.s32.totalorder %v772, 16
      %vm783 = vcmp.lt.s32.totalorder %v773, 16
      %vm784 = vcmp.lt.s32.totalorder %v774, 16
      %vm785 = vcmp.lt.s32.totalorder %v775, 16
      %vm786 = vcmp.lt.s32.totalorder %v776, 16
      %vm787 = vmand %vm777, %vm782
      %vm788 = vmand %vm778, %vm783
      %vm789 = vmand %vm779, %vm784
      %vm790 = vmand %vm780, %vm785
      %vm791 = vmand %vm781, %vm786
      %v792 = vsel %vm787, 1, 0
      %v793 = vsel %vm788, 1, 0
      %v794 = vsel %vm789, 1, 0
      %v795 = vsel %vm790, 1, 0
      %v796 = vsel %vm791, 1, 0
      %vm797 = vcmp.eq.s32.totalorder %v792, 1
      %vm798 = vcmp.eq.s32.totalorder %v793, 1
      %vm799 = vcmp.eq.s32.totalorder %v794, 1
      %vm800 = vcmp.eq.s32.totalorder %v795, 1
      %vm801 = vcmp.eq.s32.totalorder %v796, 1
      %v802 = vsel %vm797, %v758, 0.0
      %v803 = vsel %vm798, %v759, 0.0
      %v804 = vsel %vm799, %v760, 0.0
      %v805 = vsel %vm800, %v761, 0.0
      %v806 = vsel %vm801, %v762, 0.0
      %v807 = vld [vmem:[%s7] sm:$0xff]
      %v808 = vld [vmem:[%s7 + $0x8] sm:$0xff]
      %v809 = vld [vmem:[%s7 + $0x10] sm:$0xff]
      %v810 = vld [vmem:[%s7 + $0x18] sm:$0x7f]
      %v811 = vld [vmem:[%s8] sm:$0x1]
      %v812 = vlaneseq
      %v813 = vshrl.u32 %v812, 7
      %v814 = vsub.s32 0, %v813
      %v815 = vrot.slane %v807, %v814
      %v816 = vmul.f32 %v802, %v815
      %v817 = vmul.f32 %v803, %v815
      %v819 = vlaneseq
      %v820 = vshrl.u32 %v819, 7
      %v821 = vsub.s32 0, %v820
      %v822 = vrot.slane %v811, %v821
      %v824 = vadd.f32 %v822, %v816
      %v825 = vadd.f32 %v822, %v817
      %v826 = vlaneseq
      %v827 = vshrl.u32 %v826, 7
      %v828 = vsub.s32 1, %v827
      %v829 = vrot.slane %v807, %v828
      %v830 = vmul.f32 %v802, %v829
      %v831 = vmul.f32 %v803, %v829
      %vm834 = vcmask 1046528
      %v835 = vrot.slane %v830, 1
      %v836 = vrot.slane %v831, 1
      %v837 = vsel %vm834, %v835, %v836
      %v840 = vadd.f32 %v824, %v837
      %v841 = vadd.f32 %v825, %v836
      %v842 = vlaneseq
      %v843 = vshrl.u32 %v842, 7
      %v844 = vsub.s32 2, %v843
      %v845 = vrot.slane %v807, %v844
      %v846 = vmul.f32 %v802, %v845
      %v847 = vmul.f32 %v803, %v845
      %vm850 = vcmask 1045504
      %v851 = vrot.slane %v846, 2
      %v852 = vrot.slane %v847, 2
      %v853 = vsel %vm850, %v851, %v852
      %v856 = vadd.f32 %v840, %v853
      %v857 = vadd.f32 %v841, %v852
      %v858 = vlaneseq
      %v859 = vshrl.u32 %v858, 7
      %v860 = vsub.s32 3, %v859
      %v861 = vrot.slane %v807, %v860
      %v862 = vmul.f32 %v802, %v861
      %v863 = vmul.f32 %v803, %v861
      %vm866 = vcmask 1044480
      %v867 = vrot.slane %v862, 3
      %v868 = vrot.slane %v863, 3
      %v869 = vsel %vm866, %v867, %v868
      %v872 = vadd.f32 %v856, %v869
      %v873 = vadd.f32 %v857, %v868
      %v874 = vlaneseq
      %v875 = vshrl.u32 %v874, 7
      %v876 = vsub.s32 4, %v875
      %v877 = vrot.slane %v807, %v876
      %v878 = vmul.f32 %v802, %v877
      %v879 = vmul.f32 %v803, %v877
      %vm882 = vcmask 1043456
      %v883 = vrot.slane %v878, 4
      %v884 = vrot.slane %v879, 4
      %v885 = vsel %vm882, %v883, %v884
      %v888 = vadd.f32 %v872, %v885
      %v889 = vadd.f32 %v873, %v884
      %v890 = vlaneseq
      %v891 = vshrl.u32 %v890, 7
      %v892 = vsub.s32 5, %v891
      %v893 = vrot.slane %v807, %v892
      %v894 = vmul.f32 %v802, %v893
      %v895 = vmul.f32 %v803, %v893
      %vm898 = vcmask 1042432
      %v899 = vrot.slane %v894, 5
      %v900 = vrot.slane %v895, 5
      %v901 = vsel %vm898, %v899, %v900
      %v904 = vadd.f32 %v888, %v901
      %v905 = vadd.f32 %v889, %v900
      %v906 = vlaneseq
      %v907 = vshrl.u32 %v906, 7
      %v908 = vsub.s32 6, %v907
      %v909 = vrot.slane %v807, %v908
      %v910 = vmul.f32 %v802, %v909
      %v911 = vmul.f32 %v803, %v909
      %vm914 = vcmask 1041408
      %v915 = vrot.slane %v910, 6
      %v916 = vrot.slane %v911, 6
      %v917 = vsel %vm914, %v915, %v916
      %v920 = vadd.f32 %v904, %v917
      %v921 = vadd.f32 %v905, %v916
      %v922 = vlaneseq
      %v923 = vshrl.u32 %v922, 7
      %v924 = vsub.s32 7, %v923
      %v925 = vrot.slane %v807, %v924
      %v926 = vmul.f32 %v803, %v925
      %v928 = vrot.slane %v926, 7
      %v930 = vadd.f32 %v920, %v928
      %v931 = vadd.f32 %v921, %v928
      %v932 = vlaneseq
      %v933 = vshrl.u32 %v932, 7
      %v934 = vsub.s32 0, %v933
      %v935 = vrot.slane %v808, %v934
      %v936 = vmul.f32 %v803, %v935
      %v937 = vmul.f32 %v804, %v935
      %v938 = vadd.f32 %v930, %v936
      %v939 = vadd.f32 %v931, %v937
      %v940 = vlaneseq
      %v941 = vshrl.u32 %v940, 7
      %v942 = vsub.s32 1, %v941
      %v943 = vrot.slane %v808, %v942
      %v944 = vmul.f32 %v803, %v943
      %v945 = vmul.f32 %v804, %v943
      %v948 = vrot.slane %v944, 1
      %v949 = vrot.slane %v945, 1
      %v950 = vsel %vm834, %v948, %v949
      %v953 = vadd.f32 %v938, %v950
      %v954 = vadd.f32 %v939, %v949
      %v955 = vlaneseq
      %v956 = vshrl.u32 %v955, 7
      %v957 = vsub.s32 2, %v956
      %v958 = vrot.slane %v808, %v957
      %v959 = vmul.f32 %v803, %v958
      %v960 = vmul.f32 %v804, %v958
      %v963 = vrot.slane %v959, 2
      %v964 = vrot.slane %v960, 2
      %v965 = vsel %vm850, %v963, %v964
      %v968 = vadd.f32 %v953, %v965
      %v969 = vadd.f32 %v954, %v964
      %v970 = vlaneseq
      %v971 = vshrl.u32 %v970, 7
      %v972 = vsub.s32 3, %v971
      %v973 = vrot.slane %v808, %v972
      %v974 = vmul.f32 %v803, %v973
      %v975 = vmul.f32 %v804, %v973
      %v978 = vrot.slane %v974, 3
      %v979 = vrot.slane %v975, 3
      %v980 = vsel %vm866, %v978, %v979
      %v983 = vadd.f32 %v968, %v980
      %v984 = vadd.f32 %v969, %v979
      %v985 = vlaneseq
      %v986 = vshrl.u32 %v985, 7
      %v987 = vsub.s32 4, %v986
      %v988 = vrot.slane %v808, %v987
      %v989 = vmul.f32 %v803, %v988
      %v990 = vmul.f32 %v804, %v988
      %v993 = vrot.slane %v989, 4
      %v994 = vrot.slane %v990, 4
      %v995 = vsel %vm882, %v993, %v994
      %v998 = vadd.f32 %v983, %v995
      %v999 = vadd.f32 %v984, %v994
      %v1000 = vlaneseq
      %v1001 = vshrl.u32 %v1000, 7
      %v1002 = vsub.s32 5, %v1001
      %v1003 = vrot.slane %v808, %v1002
      %v1004 = vmul.f32 %v803, %v1003
      %v1005 = vmul.f32 %v804, %v1003
      %v1008 = vrot.slane %v1004, 5
      %v1009 = vrot.slane %v1005, 5
      %v1010 = vsel %vm898, %v1008, %v1009
      %v1013 = vadd.f32 %v998, %v1010
      %v1014 = vadd.f32 %v999, %v1009
      %v1015 = vlaneseq
      %v1016 = vshrl.u32 %v1015, 7
      %v1017 = vsub.s32 6, %v1016
      %v1018 = vrot.slane %v808, %v1017
      %v1019 = vmul.f32 %v803, %v1018
      %v1020 = vmul.f32 %v804, %v1018
      %v1023 = vrot.slane %v1019, 6
      %v1024 = vrot.slane %v1020, 6
      %v1025 = vsel %vm914, %v1023, %v1024
      %v1028 = vadd.f32 %v1013, %v1025
      %v1029 = vadd.f32 %v1014, %v1024
      %v1030 = vlaneseq
      %v1031 = vshrl.u32 %v1030, 7
      %v1032 = vsub.s32 7, %v1031
      %v1033 = vrot.slane %v808, %v1032
      %v1034 = vmul.f32 %v804, %v1033
      %v1036 = vrot.slane %v1034, 7
      %v1038 = vadd.f32 %v1028, %v1036
      %v1039 = vadd.f32 %v1029, %v1036
      %v1040 = vlaneseq
      %v1041 = vshrl.u32 %v1040, 7
      %v1042 = vsub.s32 0, %v1041
      %v1043 = vrot.slane %v809, %v1042
      %v1044 = vmul.f32 %v804, %v1043
      %v1045 = vmul.f32 %v805, %v1043
      %v1046 = vadd.f32 %v1038, %v1044
      %v1047 = vadd.f32 %v1039, %v1045
      %v1048 = vlaneseq
      %v1049 = vshrl.u32 %v1048, 7
      %v1050 = vsub.s32 1, %v1049
      %v1051 = vrot.slane %v809, %v1050
      %v1052 = vmul.f32 %v804, %v1051
      %v1053 = vmul.f32 %v805, %v1051
      %v1056 = vrot.slane %v1052, 1
      %v1057 = vrot.slane %v1053, 1
      %v1058 = vsel %vm834, %v1056, %v1057
      %v1061 = vadd.f32 %v1046, %v1058
      %v1062 = vadd.f32 %v1047, %v1057
      %v1063 = vlaneseq
      %v1064 = vshrl.u32 %v1063, 7
      %v1065 = vsub.s32 2, %v1064
      %v1066 = vrot.slane %v809, %v1065
      %v1067 = vmul.f32 %v804, %v1066
      %v1068 = vmul.f32 %v805, %v1066
      %v1071 = vrot.slane %v1067, 2
      %v1072 = vrot.slane %v1068, 2
      %v1073 = vsel %vm850, %v1071, %v1072
      %v1076 = vadd.f32 %v1061, %v1073
      %v1077 = vadd.f32 %v1062, %v1072
      %v1078 = vlaneseq
      %v1079 = vshrl.u32 %v1078, 7
      %v1080 = vsub.s32 3, %v1079
      %v1081 = vrot.slane %v809, %v1080
      %v1082 = vmul.f32 %v804, %v1081
      %v1083 = vmul.f32 %v805, %v1081
      %v1086 = vrot.slane %v1082, 3
      %v1087 = vrot.slane %v1083, 3
      %v1088 = vsel %vm866, %v1086, %v1087
      %v1091 = vadd.f32 %v1076, %v1088
      %v1092 = vadd.f32 %v1077, %v1087
      %v1093 = vlaneseq
      %v1094 = vshrl.u32 %v1093, 7
      %v1095 = vsub.s32 4, %v1094
      %v1096 = vrot.slane %v809, %v1095
      %v1097 = vmul.f32 %v804, %v1096
      %v1098 = vmul.f32 %v805, %v1096
      %v1101 = vrot.slane %v1097, 4
      %v1102 = vrot.slane %v1098, 4
      %v1103 = vsel %vm882, %v1101, %v1102
      %v1106 = vadd.f32 %v1091, %v1103
      %v1107 = vadd.f32 %v1092, %v1102
      %v1108 = vlaneseq
      %v1109 = vshrl.u32 %v1108, 7
      %v1110 = vsub.s32 5, %v1109
      %v1111 = vrot.slane %v809, %v1110
      %v1112 = vmul.f32 %v804, %v1111
      %v1113 = vmul.f32 %v805, %v1111
      %v1116 = vrot.slane %v1112, 5
      %v1117 = vrot.slane %v1113, 5
      %v1118 = vsel %vm898, %v1116, %v1117
      %v1121 = vadd.f32 %v1106, %v1118
      %v1122 = vadd.f32 %v1107, %v1117
      %v1123 = vlaneseq
      %v1124 = vshrl.u32 %v1123, 7
      %v1125 = vsub.s32 6, %v1124
      %v1126 = vrot.slane %v809, %v1125
      %v1127 = vmul.f32 %v804, %v1126
      %v1128 = vmul.f32 %v805, %v1126
      %v1131 = vrot.slane %v1127, 6
      %v1132 = vrot.slane %v1128, 6
      %v1133 = vsel %vm914, %v1131, %v1132
      %v1136 = vadd.f32 %v1121, %v1133
      %v1137 = vadd.f32 %v1122, %v1132
      %v1138 = vlaneseq
      %v1139 = vshrl.u32 %v1138, 7
      %v1140 = vsub.s32 7, %v1139
      %v1141 = vrot.slane %v809, %v1140
      %v1142 = vmul.f32 %v805, %v1141
      %v1144 = vrot.slane %v1142, 7
      %v1146 = vadd.f32 %v1136, %v1144
      %v1147 = vadd.f32 %v1137, %v1144
      %v1148 = vlaneseq
      %v1149 = vshrl.u32 %v1148, 7
      %v1150 = vsub.s32 0, %v1149
      %v1151 = vrot.slane %v810, %v1150
      %v1152 = vmul.f32 %v805, %v1151
      %v1153 = vmul.f32 %v806, %v1151
      %v1154 = vadd.f32 %v1146, %v1152
      %v1155 = vadd.f32 %v1147, %v1153
      %v1156 = vlaneseq
      %v1157 = vshrl.u32 %v1156, 7
      %v1158 = vsub.s32 1, %v1157
      %v1159 = vrot.slane %v810, %v1158
      %v1160 = vmul.f32 %v805, %v1159
      %v1161 = vmul.f32 %v806, %v1159
      %v1164 = vrot.slane %v1160, 1
      %v1165 = vrot.slane %v1161, 1
      %v1166 = vsel %vm834, %v1164, %v1165
      %v1169 = vadd.f32 %v1154, %v1166
      %v1170 = vadd.f32 %v1155, %v1165
      %v1171 = vlaneseq
      %v1172 = vshrl.u32 %v1171, 7
      %v1173 = vsub.s32 2, %v1172
      %v1174 = vrot.slane %v810, %v1173
      %v1175 = vmul.f32 %v805, %v1174
      %v1176 = vmul.f32 %v806, %v1174
      %v1179 = vrot.slane %v1175, 2
      %v1180 = vrot.slane %v1176, 2
      %v1181 = vsel %vm850, %v1179, %v1180
      %v1184 = vadd.f32 %v1169, %v1181
      %v1185 = vadd.f32 %v1170, %v1180
      %v1186 = vlaneseq
      %v1187 = vshrl.u32 %v1186, 7
      %v1188 = vsub.s32 3, %v1187
      %v1189 = vrot.slane %v810, %v1188
      %v1190 = vmul.f32 %v805, %v1189
      %v1191 = vmul.f32 %v806, %v1189
      %v1194 = vrot.slane %v1190, 3
      %v1195 = vrot.slane %v1191, 3
      %v1196 = vsel %vm866, %v1194, %v1195
      %v1199 = vadd.f32 %v1184, %v1196
      %v1200 = vadd.f32 %v1185, %v1195
      %v1201 = vlaneseq
      %v1202 = vshrl.u32 %v1201, 7
      %v1203 = vsub.s32 4, %v1202
      %v1204 = vrot.slane %v810, %v1203
      %v1205 = vmul.f32 %v805, %v1204
      %v1206 = vmul.f32 %v806, %v1204
      %v1209 = vrot.slane %v1205, 4
      %v1210 = vrot.slane %v1206, 4
      %v1211 = vsel %vm882, %v1209, %v1210
      %v1214 = vadd.f32 %v1199, %v1211
      %v1215 = vadd.f32 %v1200, %v1210
      %v1216 = vlaneseq
      %v1217 = vshrl.u32 %v1216, 7
      %v1218 = vsub.s32 5, %v1217
      %v1219 = vrot.slane %v810, %v1218
      %v1220 = vmul.f32 %v805, %v1219
      %v1221 = vmul.f32 %v806, %v1219
      %v1224 = vrot.slane %v1220, 5
      %v1225 = vrot.slane %v1221, 5
      %v1226 = vsel %vm898, %v1224, %v1225
      %v1229 = vadd.f32 %v1214, %v1226
      %v1230 = vadd.f32 %v1215, %v1225
      %v1231 = vlaneseq
      %v1232 = vshrl.u32 %v1231, 7
      %v1233 = vsub.s32 6, %v1232
      %v1234 = vrot.slane %v810, %v1233
      %v1235 = vmul.f32 %v805, %v1234
      %v1236 = vmul.f32 %v806, %v1234
      %v1239 = vrot.slane %v1235, 6
      %v1240 = vrot.slane %v1236, 6
      %v1241 = vsel %vm914, %v1239, %v1240
      %v1244 = vadd.f32 %v1229, %v1241
      %v1245 = vadd.f32 %v1230, %v1240
      %v1246 = vxor.u32 %v1244, 2147483648
      %v1247 = vxor.u32 %v1245, 2147483648
      %v1248 = vmul.f32 %v1246, 1.442695
      %v1249 = vpow.pop %v1248
      %v1250 = vmul.f32 %v1247, 1.442695
      %v1251 = vpow.pop %v1250
      %v1252 = vadd.f32 %v1249, 1.0
      %v1253 = vadd.f32 %v1251, 1.0
      %v1254 = vrcp.pop %v1252
      %v1255 = vmul.f32 1.0, %v1254
      %v1256 = vrcp.pop %v1253
      %v1257 = vmul.f32 1.0, %v1256
      %v1258 = vmul.f32 %v1244, %v1255
      %v1259 = vmul.f32 %v1245, %v1257
      %v1260 = vld [vmem:[%s9] sm:$0xff]
      %v1261 = vld [vmem:[%s9 + $0x8] sm:$0xff]
      %v1262 = vld [vmem:[%s10] sm:$0x1]
      %v1264 = vlaneseq
      %v1265 = vshrl.u32 %v1264, 7
      %v1266 = vsub.s32 0, %v1265
      %v1267 = vrot.slane %v1262, %v1266
      %v1271 = vrot.slane %v1258, 1
      %v1272 = vrot.slane %v1259, 1
      %v1273 = vsel %vm834, %v1271, %v1272
      %vm1274 = vcmask 130048
      %v1275 = vsel %vm1274, %v1273, 0
      %1277 = vmatprep.subr.mxu0 0.0
      %1278 = vmatpush1.msra.mxu0 0.0
      %1279 = vmatprep.subr.mxu0 0.0
      %1280 = vmatpush1.msra.mxu0 0.0
      %1281 = vmatprep.subr.mxu0 0.0
      %1282 = vmatpush1.msra.mxu0 0.0
      %1283 = vmatprep.subr.mxu0 0.0
      %1284 = vmatpush1.msra.mxu0 0.0
      %1285 = vmatprep.subr.mxu0 0.0
      %1286 = vmatpush1.msra.mxu0 0.0
      %1287 = vmatprep.subr.mxu0 0.0
      %1288 = vmatpush1.msra.mxu0 0.0
      %1289 = vmatprep.subr.mxu0 0.0
      %1290 = vmatpush1.msra.mxu0 0.0
      %1291 = vmatprep.subr.mxu0 0.0
      %1292 = vmatpush1.msra.mxu0 0.0
      %1293 = vmatprep.subr.mxu0 0.0
      %1294 = vmatpush1.msra.mxu0 0.0
      %1295 = vmatprep.subr.mxu0 0.0
      %1296 = vmatpush1.msra.mxu0 0.0
      %1297 = vmatprep.subr.mxu0 0.0
      %1298 = vmatpush1.msra.mxu0 0.0
      %1299 = vmatprep.subr.mxu0 0.0
      %1300 = vmatpush1.msra.mxu0 0.0
      %1301 = vmatprep.subr.mxu0 0.0
      %1302 = vmatpush1.msra.mxu0 0.0
      %1303 = vmatprep.subr.mxu0 0.0
      %1304 = vmatpush1.msra.mxu0 0.0
      %1305 = vmatprep.subr.mxu0 0.0
      %1306 = vmatpush1.msra.mxu0 %v1261
      %1307 = vmatprep.subr.mxu0 0.0
      %1308 = vmatpush1.msra.mxu0 %v1260
      %1309 = vmatprep.subr.mxu0 0.0
      %1310 = vmatpush2.msra.mxu0 0.0
      %1311 = vmatprep.subr.mxu0 0.0
      %1312 = vmatpush2.msra.mxu0 0.0
      %1313 = vmatprep.subr.mxu0 0.0
      %1314 = vmatpush2.msra.mxu0 0.0
      %1315 = vmatprep.subr.mxu0 0.0
      %1316 = vmatpush2.msra.mxu0 0.0
      %1317 = vmatprep.subr.mxu0 0.0
      %1318 = vmatpush2.msra.mxu0 0.0
      %1319 = vmatprep.subr.mxu0 0.0
      %1320 = vmatpush2.msra.mxu0 0.0
      %1321 = vmatprep.subr.mxu0 0.0
      %1322 = vmatpush2.msra.mxu0 0.0
      %1323 = vmatprep.subr.mxu0 0.0
      %1324 = vmatpush2.msra.mxu0 0.0
      %1325 = vmatprep.subr.mxu0 0.0
      %1326 = vmatpush2.msra.mxu0 0.0
      %1327 = vmatprep.subr.mxu0 0.0
      %1328 = vmatpush2.msra.mxu0 0.0
      %1329 = vmatprep.subr.mxu0 0.0
      %1330 = vmatpush2.msra.mxu0 0.0
      %1331 = vmatprep.subr.mxu0 0.0
      %1332 = vmatpush2.msra.mxu0 0.0
      %1333 = vmatprep.subr.mxu0 0.0
      %1334 = vmatpush2.msra.mxu0 0.0
      %1335 = vmatprep.subr.mxu0 0.0
      %1336 = vmatpush2.msra.mxu0 0.0
      %1337 = vmatprep.subr.mxu0 0.0
      %1338 = vmatpush2.msra.mxu0 0.0
      %1339 = vmatprep.subr.mxu0 0.0
      %1340 = vmatpush2.msra.mxu0 0.0
      %1341 = vmatprep.mubr.f32.mxu0 0.0
      %1342 = vmatmul.mubr.f32.gmra.mxu0 %v1275
      %v1343 = vpop.f32.mrf.mxu0
      %v1344 = vadd.f32 %v1267, %v1343
      %v1345 = vpop.f32.mrf.mxu0
      %1346 = vdwg.mxu0
      %1347 = vst.msk [vmem:[%s420] sm:$0xff] %vm426, %v1344
      %p1348 = scmp.lt.s32.totalorder %s26, 1
      %s1349 = scalar_select %p1348, %s26, 1
      %p1350 = scmp.lt.s32.totalorder %s27, 1
      %s1351 = scalar_select %p1350, %s27, 1
      %s1352 = smul.addr %s1349, 2
      %s1353 = sadd.s32 %s1351, %s1352
      %s1354 = smul.addr %s1353, 8
      %s1355 = scalar_lea.vmem %s11, %s1354
      // Predicated region
      $region65: #{tpu_custom_call.1} parent=63 // pred_check
        %p1356 = pneg %p292
      $region66: #{tpu_custom_call.1} parent=63 // pred_check_branch
        %1358 = sbr.rel (%p1356) target = $region68
      $region67: #{tpu_custom_call.1} parent=63 // pred_region
        _
      $region68: #{tpu_custom_call.1} parent=63 // pred_fallthru
        _
    $region64: #{tpu_custom_call.1} parent=5 // pred_fallthru
      _
    %p1359 = scmp.le.s32.totalorder 2, %s17
    // Predicated region
    $region69: #{tpu_custom_call.1} parent=5 // pred_check
      %p1360 = pneg %p1359
    $region70: #{tpu_custom_call.1} parent=5 // pred_check_branch
      %1362 = sbr.rel (%p1360) target = $region72
    $region71: #{tpu_custom_call.1} parent=5 // pred_region
      %s1363 = ssub.s32 %s17, 2
      // Predicated region
      $region73: #{tpu_custom_call.1} parent=71 // pred_check
        %p1364 = pneg %p298
      $region74: #{tpu_custom_call.1} parent=71 // pred_check_branch
        %1366 = sbr.rel (%p1364) target = $region76
      $region75: #{tpu_custom_call.1} parent=71 // pred_region
        %p1367 = scmp.lt.s32.totalorder %s28, 1
        %s1368 = scalar_select %p1367, %s28, 1
        %p1369 = scmp.lt.s32.totalorder %s29, 1
        %s1370 = scalar_select %p1369, %s29, 1
        %s1371 = smul.addr %s1368, 2
        %s1372 = sadd.s32 %s1370, %s1371
        %s1373 = smul.addr %s1372, 8
        %s1374 = scalar_lea.vmem %s11, %s1373
      $region76: #{tpu_custom_call.1} parent=71 // pred_fallthru
        _
    $region72: #{tpu_custom_call.1} parent=5 // pred_fallthru
      _
  $region6: #{tpu_custom_call.1} parent=0 // loop_footer
    %s21 = sadd.s32 1, %s17
  $region7: #{tpu_custom_call.1} parent=0 // loop_footer_branch
    %16 = sbr.rel target = $region3
  $region8: #{tpu_custom_call.1} parent=0 // loop_exit
    _

</llo_original>
